<compile_context>
chip_gen: v7x
topology: tpu7x:2x2x1
jax: 0.10.0
libtpu: 0.0.40
codegen_flags: <defaults>
</compile_context>

<pallas_src>
import jax
import jax.numpy as jnp
from jax.experimental import pallas as pl
from jax.experimental.pallas import tpu as pltpu

EPS = 1e-5


def double_conv_kernel(x_ref, w1_ref, g1_ref, be1_ref, w2_ref, g2_ref, be2_ref,
                       gat_ref, sct_ref, out_ref, xpad_ref, ypad_ref):
    # x_ref  : (N, H, W*Cin)  bf16  unpadded input rows, channels packed on lanes
    # w*_ref : (3, W*C, W*Cout) bf16 banded weights (one matrix per kernel row kh,
    #                               horizontal zero-pad folded into the band)
    # g*,be* : (1, Cout)      f32   BN affine params
    # gat_ref: (W*Cout, Cout) f32   per-channel gather matrix, pre-scaled by 1/(N*H*W)
    # sct_ref: (Cout, W*Cout) f32   per-channel scatter (broadcast) matrix
    # out_ref: (N*H, W*Cout)  f32   lane-dense output rows
    # xpad_ref: (N, H+2, W*Cin)  f32 scratch (row-padded input)
    # ypad_ref: (N, H+2, W*Cout) f32 scratch (row-padded intermediate)
    N, H, WCin = x_ref.shape
    NH, WC = out_ref.shape

    def conv_rows(pad_ref, w_ref):
        # 3x3 conv == sum over kh of (N*H, W*C) @ (W*C, W*Cout) banded matmuls.
        # bf16 MXU operands, f32 accumulation.
        slab = pad_ref[...]                                   # single VMEM load
        acc = jnp.zeros((NH, w_ref.shape[-1]), jnp.float32)
        for kh in range(3):                                   # static unroll
            rows = slab[:, kh:kh + H, :].reshape(NH, slab.shape[-1])
            acc = acc + jnp.dot(rows.astype(jnp.bfloat16), w_ref[kh],
                                preferred_element_type=jnp.float32)
        return acc

    def bn_relu(y, g_ref, be_ref):
        # One-pass batch stats in f32.  The channel gather/scatter matmuls are
        # fused: one (2, WC)@(WC, Cout) and one (2, Cout)@(Cout, WC).
        s = jnp.sum(y, axis=0, keepdims=True)                 # (1, W*Cout)
        ss = jnp.sum(y * y, axis=0, keepdims=True)            # (1, W*Cout)
        red = jnp.dot(jnp.concatenate([s, ss], axis=0), gat_ref[...],
                      preferred_element_type=jnp.float32)     # (2, Cout): [mean, E[x^2]]
        mean = red[0:1, :]
        var = jnp.maximum(red[1:2, :] - mean * mean, 0.0)
        scale = g_ref[...] * jax.lax.rsqrt(var + EPS)         # (1, Cout)
        shift = be_ref[...] - mean * scale                    # (1, Cout)
        aff = jnp.dot(jnp.concatenate([scale, shift], axis=0), sct_ref[...],
                      preferred_element_type=jnp.float32)     # (2, W*Cout)
        return jnp.maximum(y * aff[0:1, :] + aff[1:2, :], 0.0)

    # ---- stage the input into the H-padded scratch (zero only the halo rows) ----
    xpad_ref[:, 0:1, :] = jnp.zeros((N, 1, WCin), jnp.float32)
    xpad_ref[:, H + 1:H + 2, :] = jnp.zeros((N, 1, WCin), jnp.float32)
    xpad_ref[:, 1:H + 1, :] = x_ref[...].astype(jnp.float32)

    # ---- conv1 + bn1 + relu (conv bias dropped: cancelled by BN mean sub) ----
    y1 = bn_relu(conv_rows(xpad_ref, w1_ref), g1_ref, be1_ref)

    # ---- stage y1 into the H-padded scratch (zero only the halo rows) ----
    ypad_ref[:, 0:1, :] = jnp.zeros((N, 1, WC), jnp.float32)
    ypad_ref[:, H + 1:H + 2, :] = jnp.zeros((N, 1, WC), jnp.float32)
    ypad_ref[:, 1:H + 1, :] = y1.reshape(N, H, WC)

    # ---- conv2 + bn2 + relu ----
    y2 = bn_relu(conv_rows(ypad_ref, w2_ref), g2_ref, be2_ref)
    out_ref[...] = y2.astype(out_ref.dtype)


def _band_weights(w_oihw, W):
    """(Cout, Cin, 3, 3) OIHW conv weights -> (3, W*Cin, W*Cout) banded matrices.

    M[kh, wi*Cin + ci, wo*Cout + co] = w[co, ci, kh, wi - wo + 1] inside the band,
    0 outside — which also folds the horizontal zero-padding of the conv into the
    weights, so the kernel only needs vertical (row) padding of activations.
    """
    Cout, Cin, KH, KW = w_oihw.shape
    w_hwio = jnp.transpose(w_oihw, (2, 3, 1, 0)).astype(jnp.float32)  # (3,3,Cin,Cout)
    wi = jnp.arange(W)[:, None]          # input column index
    wo = jnp.arange(W)[None, :]          # output column index
    kw = wi - wo + 1                     # (W, W)
    valid = (kw >= 0) & (kw < KW)
    kw_safe = jnp.clip(kw, 0, KW - 1)
    m = w_hwio[:, kw_safe]                                     # (3, W, W, Cin, Cout)
    m = jnp.where(valid[None, :, :, None, None], m, 0.0)
    m = jnp.transpose(m, (0, 1, 3, 2, 4))                      # (3, W, Cin, W, Cout)
    return m.reshape(KH, W * Cin, W * Cout)


def double_conv(x_nchw, params):
    """Pallas DoubleConv. x_nchw: (N, Cin, H, W) f32 -> (N, Cout, H, W) f32."""
    w1, b1, g1, be1, w2, b2, g2, be2 = params
    del b1, b2  # conv bias is exactly cancelled by training-mode BN mean subtraction
    N, Cin, H, W = x_nchw.shape
    Cout = w1.shape[0]
    WC = W * Cout

    # NCHW -> lane-packed rows (N, H, W*Cin), bf16 for the MXU LHS / half the DMA.
    # TODO(synk): when chained inside a UNet, keep this packed layout between layers
    #             and skip the NCHW round trips entirely.
    x_rows = (jnp.transpose(x_nchw, (0, 2, 3, 1))
              .reshape(N, H, W * Cin).astype(jnp.bfloat16))

    m1 = _band_weights(w1, W).astype(jnp.bfloat16)             # (3, W*Cin,  W*Cout)
    m2 = _band_weights(w2, W).astype(jnp.bfloat16)             # (3, W*Cout, W*Cout)

    # Per-channel gather / scatter matrices for BN stats in packed layout;
    # the 1/(N*H*W) stat normalizer is pre-folded into the gather matrix.
    lane_ch = jnp.arange(WC) % Cout
    eye = (lane_ch[:, None] == jnp.arange(Cout)[None, :]).astype(jnp.float32)
    gat = eye / float(N * H * W)                               # (WC, Cout)
    sct = eye.T                                                # (Cout, WC)

    row = lambda v: v.reshape(1, Cout).astype(jnp.float32)
    args = (x_rows, m1, row(g1), row(be1), m2, row(g2), row(be2), gat, sct)

    vmem = pl.BlockSpec(memory_space=pltpu.MemorySpace.VMEM)
    out_rows = pl.pallas_call(
        double_conv_kernel,
        out_shape=jax.ShapeDtypeStruct((N * H, WC), jnp.float32),
        in_specs=[vmem] * len(args),
        out_specs=vmem,
        scratch_shapes=[pltpu.VMEM((N, H + 2, W * Cin), jnp.float32),
                        pltpu.VMEM((N, H + 2, WC), jnp.float32)],
        compiler_params=pltpu.CompilerParams(vmem_limit_bytes=32 * 1024 * 1024),
    )(*args)

    # (N*H, W*Cout) lane-dense slab -> NCHW for the PyTorch-convention caller.
    return jnp.transpose(out_rows.reshape(N, H, W, Cout), (0, 3, 1, 2))


def ref_double_conv(x_nchw, params):
    """Pure-JAX f32 reference matching PyTorch DoubleConv (training-mode BN)."""
    w1, b1, g1, be1, w2, b2, g2, be2 = params

    def block(x, w, b, g, be):
        y = jax.lax.conv_general_dilated(
            x, w, window_strides=(1, 1), padding=((1, 1), (1, 1)),
            dimension_numbers=('NCHW', 'OIHW', 'NCHW'))
        y = y + b[None, :, None, None]
        mean = y.mean(axis=(0, 2, 3), keepdims=True)
        var = ((y - mean) ** 2).mean(axis=(0, 2, 3), keepdims=True)
        y = (y - mean) / jnp.sqrt(var + EPS) * g[None, :, None, None] \
            + be[None, :, None, None]
        return jnp.maximum(y, 0.0)

    return block(block(x_nchw, w1, b1, g1, be1), w2, b2, g2, be2)


if __name__ == "__main__":
    key = jax.random.PRNGKey(0)
    N, Cin, Cout, H, W = 2, 4, 8, 16, 16
    ks = jax.random.split(key, 9)

    x = jax.random.normal(ks[0], (N, Cin, H, W), jnp.float32)
    w1 = 0.1 * jax.random.normal(ks[1], (Cout, Cin, 3, 3), jnp.float32)
    b1 = 0.1 * jax.random.normal(ks[2], (Cout,), jnp.float32)
    g1 = 1.0 + 0.1 * jax.random.normal(ks[3], (Cout,), jnp.float32)
    be1 = 0.1 * jax.random.normal(ks[4], (Cout,), jnp.float32)
    w2 = 0.1 * jax.random.normal(ks[5], (Cout, Cout, 3, 3), jnp.float32)
    b2 = 0.1 * jax.random.normal(ks[6], (Cout,), jnp.float32)
    g2 = 1.0 + 0.1 * jax.random.normal(ks[7], (Cout,), jnp.float32)
    be2 = 0.1 * jax.random.normal(ks[8], (Cout,), jnp.float32)
    params = (w1, b1, g1, be1, w2, b2, g2, be2)

    out = jax.block_until_ready(jax.jit(double_conv)(x, params))
    ref = jax.block_until_ready(ref_double_conv(x, params))

    assert out.shape == ref.shape == (N, Cout, H, W), (out.shape, ref.shape)
    max_err = float(jnp.max(jnp.abs(out - ref)))
    # bf16 MXU operands through two conv+BN stages: tolerance relaxed from 2e-4.
    assert max_err < 1e-1, f"max_err={max_err}"
    print("KERNEL_OK")
</pallas_src>

<mosaic_0001>
module attributes {stable_mosaic.version = 11 : i64} {
  func.func @double_conv_kernel(%arg0: memref<2x16x64xbf16, #tpu.memory_space<vmem>>, %arg1: memref<3x64x128xbf16, #tpu.memory_space<vmem>>, %arg2: memref<1x8xf32, #tpu.memory_space<vmem>>, %arg3: memref<1x8xf32, #tpu.memory_space<vmem>>, %arg4: memref<3x128x128xbf16, #tpu.memory_space<vmem>>, %arg5: memref<1x8xf32, #tpu.memory_space<vmem>>, %arg6: memref<1x8xf32, #tpu.memory_space<vmem>>, %arg7: memref<128x8xf32, #tpu.memory_space<vmem>>, %arg8: memref<8x128xf32, #tpu.memory_space<vmem>>, %arg9: memref<32x128xf32, #tpu.memory_space<vmem>>, %arg10: memref<2x18x64xf32, #tpu.memory_space<vmem>>, %arg11: memref<2x18x128xf32, #tpu.memory_space<vmem>>) attributes {dimension_semantics = [], scalar_prefetch = 0 : i64, scratch_operands = 2 : i64, tpu.core_type = #tpu.core_type<tc>} {
    %cst = arith.constant 0.000000e+00 : f32
    %0 = vector.broadcast %cst : f32 to vector<2x1x64xf32>
    %c0 = arith.constant 0 : index
    %c0_0 = arith.constant 0 : index
    %c0_1 = arith.constant 0 : index
    %1 = vector.load %arg10[%c0, %c0_0, %c0_1] : memref<2x18x64xf32, #tpu.memory_space<vmem>>, vector<2x1x64xf32>
    tpu.vector_store %arg10[%c0, %c0_0, %c0_1], %0 {strides = array<i32>} : memref<2x18x64xf32, #tpu.memory_space<vmem>>, vector<2x1x64xf32>,
    %cst_2 = arith.constant 0.000000e+00 : f32
    %2 = vector.broadcast %cst_2 : f32 to vector<2x1x64xf32>
    %c0_3 = arith.constant 0 : index
    %c17 = arith.constant 17 : index
    %c0_4 = arith.constant 0 : index
    %3 = vector.load %arg10[%c0_3, %c17, %c0_4] : memref<2x18x64xf32, #tpu.memory_space<vmem>>, vector<2x1x64xf32>
    tpu.vector_store %arg10[%c0_3, %c17, %c0_4], %2 {strides = array<i32>} : memref<2x18x64xf32, #tpu.memory_space<vmem>>, vector<2x1x64xf32>,
    %c0_5 = arith.constant 0 : index
    %c0_6 = arith.constant 0 : index
    %c0_7 = arith.constant 0 : index
    %4 = vector.load %arg0[%c0_5, %c0_6, %c0_7] : memref<2x16x64xbf16, #tpu.memory_space<vmem>>, vector<2x16x64xbf16>
    %5 = arith.extf %4 : vector<2x16x64xbf16> to vector<2x16x64xf32>
    %c0_8 = arith.constant 0 : index
    %c1 = arith.constant 1 : index
    %c0_9 = arith.constant 0 : index
    %6 = vector.load %arg10[%c0_8, %c1, %c0_9] : memref<2x18x64xf32, #tpu.memory_space<vmem>>, vector<2x16x64xf32>
    tpu.vector_store %arg10[%c0_8, %c1, %c0_9], %5 {strides = array<i32>} : memref<2x18x64xf32, #tpu.memory_space<vmem>>, vector<2x16x64xf32>,
    %c0_10 = arith.constant 0 : index
    %c0_11 = arith.constant 0 : index
    %c0_12 = arith.constant 0 : index
    %7 = vector.load %arg10[%c0_10, %c0_11, %c0_12] : memref<2x18x64xf32, #tpu.memory_space<vmem>>, vector<2x18x64xf32>
    %cst_13 = arith.constant 0.000000e+00 : f32
    %8 = vector.broadcast %cst_13 : f32 to vector<32x128xf32>
    %9 = vector.extract_strided_slice %7 {offsets = [0, 0, 0], sizes = [2, 16, 64], strides = [1, 1, 1]} : vector<2x18x64xf32> to vector<2x16x64xf32>
    %10 = vector.shape_cast %9 : vector<2x16x64xf32> to vector<32x64xf32>
    %11 = arith.truncf %10 : vector<32x64xf32> to vector<32x64xbf16>
    %c0_14 = arith.constant 0 : index
    %c0_15 = arith.constant 0 : index
    %c0_16 = arith.constant 0 : index
    %12 = vector.load %arg1[%c0_14, %c0_15, %c0_16] : memref<3x64x128xbf16, #tpu.memory_space<vmem>>, vector<1x64x128xbf16>
    %13 = vector.shape_cast %12 : vector<1x64x128xbf16> to vector<64x128xbf16>
    %cst_17 = arith.constant dense<0.000000e+00> : vector<32x128xf32>
    %14 = tpu.matmul %11, %13, %cst_17 {dimension_numbers = #tpu.dot_dimension_numbers<[1], [0], [0], [1], [0, 0, 1, 1], [], []>} : vector<32x64xbf16>, vector<64x128xbf16>, vector<32x128xf32> -> vector<32x128xf32>
    %15 = arith.addf %8, %14 : vector<32x128xf32>
    %16 = vector.extract_strided_slice %7 {offsets = [0, 1, 0], sizes = [2, 16, 64], strides = [1, 1, 1]} : vector<2x18x64xf32> to vector<2x16x64xf32>
    %17 = vector.shape_cast %16 : vector<2x16x64xf32> to vector<32x64xf32>
    %18 = arith.truncf %17 : vector<32x64xf32> to vector<32x64xbf16>
    %c1_18 = arith.constant 1 : index
    %c0_19 = arith.constant 0 : index
    %c0_20 = arith.constant 0 : index
    %19 = vector.load %arg1[%c1_18, %c0_19, %c0_20] : memref<3x64x128xbf16, #tpu.memory_space<vmem>>, vector<1x64x128xbf16>
    %20 = vector.shape_cast %19 : vector<1x64x128xbf16> to vector<64x128xbf16>
    %cst_21 = arith.constant dense<0.000000e+00> : vector<32x128xf32>
    %21 = tpu.matmul %18, %20, %cst_21 {dimension_numbers = #tpu.dot_dimension_numbers<[1], [0], [0], [1], [0, 0, 1, 1], [], []>} : vector<32x64xbf16>, vector<64x128xbf16>, vector<32x128xf32> -> vector<32x128xf32>
    %22 = arith.addf %15, %21 : vector<32x128xf32>
    %23 = vector.extract_strided_slice %7 {offsets = [0, 2, 0], sizes = [2, 16, 64], strides = [1, 1, 1]} : vector<2x18x64xf32> to vector<2x16x64xf32>
    %24 = vector.shape_cast %23 : vector<2x16x64xf32> to vector<32x64xf32>
    %25 = arith.truncf %24 : vector<32x64xf32> to vector<32x64xbf16>
    %c2 = arith.constant 2 : index
    %c0_22 = arith.constant 0 : index
    %c0_23 = arith.constant 0 : index
    %26 = vector.load %arg1[%c2, %c0_22, %c0_23] : memref<3x64x128xbf16, #tpu.memory_space<vmem>>, vector<1x64x128xbf16>
    %27 = vector.shape_cast %26 : vector<1x64x128xbf16> to vector<64x128xbf16>
    %cst_24 = arith.constant dense<0.000000e+00> : vector<32x128xf32>
    %28 = tpu.matmul %25, %27, %cst_24 {dimension_numbers = #tpu.dot_dimension_numbers<[1], [0], [0], [1], [0, 0, 1, 1], [], []>} : vector<32x64xbf16>, vector<64x128xbf16>, vector<32x128xf32> -> vector<32x128xf32>
    %29 = arith.addf %22, %28 : vector<32x128xf32>
    %cst_25 = arith.constant dense<0.000000e+00> : vector<128xf32>
    %30 = vector.multi_reduction <add>, %29, %cst_25 [0] : vector<32x128xf32> to vector<128xf32>
    %31 = vector.shape_cast %30 : vector<128xf32> to vector<1x128xf32>
    %32 = arith.mulf %29, %29 : vector<32x128xf32>
    %cst_26 = arith.constant dense<0.000000e+00> : vector<128xf32>
    %33 = vector.multi_reduction <add>, %32, %cst_26 [0] : vector<32x128xf32> to vector<128xf32>
    %34 = vector.shape_cast %33 : vector<128xf32> to vector<1x128xf32>
    %35 = tpu.concatenate %31, %34 in 0 : vector<1x128xf32>, vector<1x128xf32> -> vector<2x128xf32>
    %c0_27 = arith.constant 0 : index
    %c0_28 = arith.constant 0 : index
    %36 = vector.load %arg7[%c0_27, %c0_28] : memref<128x8xf32, #tpu.memory_space<vmem>>, vector<128x8xf32>
    %cst_29 = arith.constant dense<0.000000e+00> : vector<2x8xf32>
    %37 = tpu.matmul %35, %36, %cst_29 {dimension_numbers = #tpu.dot_dimension_numbers<[1], [0], [0], [1], [0, 0, 1, 1], [], []>} : vector<2x128xf32>, vector<128x8xf32>, vector<2x8xf32> -> vector<2x8xf32>
    %38 = vector.extract_strided_slice %37 {offsets = [0, 0], sizes = [1, 8], strides = [1, 1]} : vector<2x8xf32> to vector<1x8xf32>
    %39 = vector.extract_strided_slice %37 {offsets = [1, 0], sizes = [1, 8], strides = [1, 1]} : vector<2x8xf32> to vector<1x8xf32>
    %40 = arith.mulf %38, %38 : vector<1x8xf32>
    %41 = arith.subf %39, %40 : vector<1x8xf32>
    %cst_30 = arith.constant 0.000000e+00 : f32
    %42 = vector.broadcast %cst_30 : f32 to vector<1x8xf32>
    %43 = arith.maximumf %41, %42 : vector<1x8xf32>
    %c0_31 = arith.constant 0 : index
    %c0_32 = arith.constant 0 : index
    %44 = vector.load %arg2[%c0_31, %c0_32] : memref<1x8xf32, #tpu.memory_space<vmem>>, vector<1x8xf32>
    %cst_33 = arith.constant 9.99999974E-6 : f32
    %45 = vector.broadcast %cst_33 : f32 to vector<1x8xf32>
    %46 = arith.addf %43, %45 : vector<1x8xf32>
    %47 = math.rsqrt %46 : vector<1x8xf32>
    %48 = arith.mulf %44, %47 : vector<1x8xf32>
    %c0_34 = arith.constant 0 : index
    %c0_35 = arith.constant 0 : index
    %49 = vector.load %arg3[%c0_34, %c0_35] : memref<1x8xf32, #tpu.memory_space<vmem>>, vector<1x8xf32>
    %50 = arith.mulf %38, %48 : vector<1x8xf32>
    %51 = arith.subf %49, %50 : vector<1x8xf32>
    %52 = tpu.concatenate %48, %51 in 0 : vector<1x8xf32>, vector<1x8xf32> -> vector<2x8xf32>
    %c0_36 = arith.constant 0 : index
    %c0_37 = arith.constant 0 : index
    %53 = vector.load %arg8[%c0_36, %c0_37] : memref<8x128xf32, #tpu.memory_space<vmem>>, vector<8x128xf32>
    %cst_38 = arith.constant dense<0.000000e+00> : vector<2x128xf32>
    %54 = tpu.matmul %52, %53, %cst_38 {dimension_numbers = #tpu.dot_dimension_numbers<[1], [0], [0], [1], [0, 0, 1, 1], [], []>} : vector<2x8xf32>, vector<8x128xf32>, vector<2x128xf32> -> vector<2x128xf32>
    %55 = vector.extract_strided_slice %54 {offsets = [0, 0], sizes = [1, 128], strides = [1, 1]} : vector<2x128xf32> to vector<1x128xf32>
    %56 = vector.broadcast %55 : vector<1x128xf32> to vector<32x128xf32>
    %57 = arith.mulf %29, %56 : vector<32x128xf32>
    %58 = vector.extract_strided_slice %54 {offsets = [1, 0], sizes = [1, 128], strides = [1, 1]} : vector<2x128xf32> to vector<1x128xf32>
    %59 = vector.broadcast %58 : vector<1x128xf32> to vector<32x128xf32>
    %60 = arith.addf %57, %59 : vector<32x128xf32>
    %cst_39 = arith.constant 0.000000e+00 : f32
    %61 = vector.broadcast %cst_39 : f32 to vector<32x128xf32>
    %62 = arith.maximumf %60, %61 : vector<32x128xf32>
    %cst_40 = arith.constant 0.000000e+00 : f32
    %63 = vector.broadcast %cst_40 : f32 to vector<2x1x128xf32>
    %c0_41 = arith.constant 0 : index
    %c0_42 = arith.constant 0 : index
    %c0_43 = arith.constant 0 : index
    %64 = vector.load %arg11[%c0_41, %c0_42, %c0_43] : memref<2x18x128xf32, #tpu.memory_space<vmem>>, vector<2x1x128xf32>
    tpu.vector_store %arg11[%c0_41, %c0_42, %c0_43], %63 {strides = array<i32>} : memref<2x18x128xf32, #tpu.memory_space<vmem>>, vector<2x1x128xf32>,
    %cst_44 = arith.constant 0.000000e+00 : f32
    %65 = vector.broadcast %cst_44 : f32 to vector<2x1x128xf32>
    %c0_45 = arith.constant 0 : index
    %c17_46 = arith.constant 17 : index
    %c0_47 = arith.constant 0 : index
    %66 = vector.load %arg11[%c0_45, %c17_46, %c0_47] : memref<2x18x128xf32, #tpu.memory_space<vmem>>, vector<2x1x128xf32>
    tpu.vector_store %arg11[%c0_45, %c17_46, %c0_47], %65 {strides = array<i32>} : memref<2x18x128xf32, #tpu.memory_space<vmem>>, vector<2x1x128xf32>,
    %67 = vector.shape_cast %62 : vector<32x128xf32> to vector<2x16x128xf32>
    %c0_48 = arith.constant 0 : index
    %c1_49 = arith.constant 1 : index
    %c0_50 = arith.constant 0 : index
    %68 = vector.load %arg11[%c0_48, %c1_49, %c0_50] : memref<2x18x128xf32, #tpu.memory_space<vmem>>, vector<2x16x128xf32>
    tpu.vector_store %arg11[%c0_48, %c1_49, %c0_50], %67 {strides = array<i32>} : memref<2x18x128xf32, #tpu.memory_space<vmem>>, vector<2x16x128xf32>,
    %c0_51 = arith.constant 0 : index
    %c0_52 = arith.constant 0 : index
    %c0_53 = arith.constant 0 : index
    %69 = vector.load %arg11[%c0_51, %c0_52, %c0_53] : memref<2x18x128xf32, #tpu.memory_space<vmem>>, vector<2x18x128xf32>
    %cst_54 = arith.constant 0.000000e+00 : f32
    %70 = vector.broadcast %cst_54 : f32 to vector<32x128xf32>
    %71 = vector.extract_strided_slice %69 {offsets = [0, 0, 0], sizes = [2, 16, 128], strides = [1, 1, 1]} : vector<2x18x128xf32> to vector<2x16x128xf32>
    %72 = vector.shape_cast %71 : vector<2x16x128xf32> to vector<32x128xf32>
    %73 = arith.truncf %72 : vector<32x128xf32> to vector<32x128xbf16>
    %c0_55 = arith.constant 0 : index
    %c0_56 = arith.constant 0 : index
    %c0_57 = arith.constant 0 : index
    %74 = vector.load %arg4[%c0_55, %c0_56, %c0_57] : memref<3x128x128xbf16, #tpu.memory_space<vmem>>, vector<1x128x128xbf16>
    %75 = vector.shape_cast %74 : vector<1x128x128xbf16> to vector<128x128xbf16>
    %cst_58 = arith.constant dense<0.000000e+00> : vector<32x128xf32>
    %76 = tpu.matmul %73, %75, %cst_58 {dimension_numbers = #tpu.dot_dimension_numbers<[1], [0], [0], [1], [0, 0, 1, 1], [], []>} : vector<32x128xbf16>, vector<128x128xbf16>, vector<32x128xf32> -> vector<32x128xf32>
    %77 = arith.addf %70, %76 : vector<32x128xf32>
    %78 = vector.extract_strided_slice %69 {offsets = [0, 1, 0], sizes = [2, 16, 128], strides = [1, 1, 1]} : vector<2x18x128xf32> to vector<2x16x128xf32>
    %79 = vector.shape_cast %78 : vector<2x16x128xf32> to vector<32x128xf32>
    %80 = arith.truncf %79 : vector<32x128xf32> to vector<32x128xbf16>
    %c1_59 = arith.constant 1 : index
    %c0_60 = arith.constant 0 : index
    %c0_61 = arith.constant 0 : index
    %81 = vector.load %arg4[%c1_59, %c0_60, %c0_61] : memref<3x128x128xbf16, #tpu.memory_space<vmem>>, vector<1x128x128xbf16>
    %82 = vector.shape_cast %81 : vector<1x128x128xbf16> to vector<128x128xbf16>
    %cst_62 = arith.constant dense<0.000000e+00> : vector<32x128xf32>
    %83 = tpu.matmul %80, %82, %cst_62 {dimension_numbers = #tpu.dot_dimension_numbers<[1], [0], [0], [1], [0, 0, 1, 1], [], []>} : vector<32x128xbf16>, vector<128x128xbf16>, vector<32x128xf32> -> vector<32x128xf32>
    %84 = arith.addf %77, %83 : vector<32x128xf32>
    %85 = vector.extract_strided_slice %69 {offsets = [0, 2, 0], sizes = [2, 16, 128], strides = [1, 1, 1]} : vector<2x18x128xf32> to vector<2x16x128xf32>
    %86 = vector.shape_cast %85 : vector<2x16x128xf32> to vector<32x128xf32>
    %87 = arith.truncf %86 : vector<32x128xf32> to vector<32x128xbf16>
    %c2_63 = arith.constant 2 : index
    %c0_64 = arith.constant 0 : index
    %c0_65 = arith.constant 0 : index
    %88 = vector.load %arg4[%c2_63, %c0_64, %c0_65] : memref<3x128x128xbf16, #tpu.memory_space<vmem>>, vector<1x128x128xbf16>
    %89 = vector.shape_cast %88 : vector<1x128x128xbf16> to vector<128x128xbf16>
    %cst_66 = arith.constant dense<0.000000e+00> : vector<32x128xf32>
    %90 = tpu.matmul %87, %89, %cst_66 {dimension_numbers = #tpu.dot_dimension_numbers<[1], [0], [0], [1], [0, 0, 1, 1], [], []>} : vector<32x128xbf16>, vector<128x128xbf16>, vector<32x128xf32> -> vector<32x128xf32>
    %91 = arith.addf %84, %90 : vector<32x128xf32>
    %cst_67 = arith.constant dense<0.000000e+00> : vector<128xf32>
    %92 = vector.multi_reduction <add>, %91, %cst_67 [0] : vector<32x128xf32> to vector<128xf32>
    %93 = vector.shape_cast %92 : vector<128xf32> to vector<1x128xf32>
    %94 = arith.mulf %91, %91 : vector<32x128xf32>
    %cst_68 = arith.constant dense<0.000000e+00> : vector<128xf32>
    %95 = vector.multi_reduction <add>, %94, %cst_68 [0] : vector<32x128xf32> to vector<128xf32>
    %96 = vector.shape_cast %95 : vector<128xf32> to vector<1x128xf32>
    %97 = tpu.concatenate %93, %96 in 0 : vector<1x128xf32>, vector<1x128xf32> -> vector<2x128xf32>
    %c0_69 = arith.constant 0 : index
    %c0_70 = arith.constant 0 : index
    %98 = vector.load %arg7[%c0_69, %c0_70] : memref<128x8xf32, #tpu.memory_space<vmem>>, vector<128x8xf32>
    %cst_71 = arith.constant dense<0.000000e+00> : vector<2x8xf32>
    %99 = tpu.matmul %97, %98, %cst_71 {dimension_numbers = #tpu.dot_dimension_numbers<[1], [0], [0], [1], [0, 0, 1, 1], [], []>} : vector<2x128xf32>, vector<128x8xf32>, vector<2x8xf32> -> vector<2x8xf32>
    %100 = vector.extract_strided_slice %99 {offsets = [0, 0], sizes = [1, 8], strides = [1, 1]} : vector<2x8xf32> to vector<1x8xf32>
    %101 = vector.extract_strided_slice %99 {offsets = [1, 0], sizes = [1, 8], strides = [1, 1]} : vector<2x8xf32> to vector<1x8xf32>
    %102 = arith.mulf %100, %100 : vector<1x8xf32>
    %103 = arith.subf %101, %102 : vector<1x8xf32>
    %cst_72 = arith.constant 0.000000e+00 : f32
    %104 = vector.broadcast %cst_72 : f32 to vector<1x8xf32>
    %105 = arith.maximumf %103, %104 : vector<1x8xf32>
    %c0_73 = arith.constant 0 : index
    %c0_74 = arith.constant 0 : index
    %106 = vector.load %arg5[%c0_73, %c0_74] : memref<1x8xf32, #tpu.memory_space<vmem>>, vector<1x8xf32>
    %cst_75 = arith.constant 9.99999974E-6 : f32
    %107 = vector.broadcast %cst_75 : f32 to vector<1x8xf32>
    %108 = arith.addf %105, %107 : vector<1x8xf32>
    %109 = math.rsqrt %108 : vector<1x8xf32>
    %110 = arith.mulf %106, %109 : vector<1x8xf32>
    %c0_76 = arith.constant 0 : index
    %c0_77 = arith.constant 0 : index
    %111 = vector.load %arg6[%c0_76, %c0_77] : memref<1x8xf32, #tpu.memory_space<vmem>>, vector<1x8xf32>
    %112 = arith.mulf %100, %110 : vector<1x8xf32>
    %113 = arith.subf %111, %112 : vector<1x8xf32>
    %114 = tpu.concatenate %110, %113 in 0 : vector<1x8xf32>, vector<1x8xf32> -> vector<2x8xf32>
    %c0_78 = arith.constant 0 : index
    %c0_79 = arith.constant 0 : index
    %115 = vector.load %arg8[%c0_78, %c0_79] : memref<8x128xf32, #tpu.memory_space<vmem>>, vector<8x128xf32>
    %cst_80 = arith.constant dense<0.000000e+00> : vector<2x128xf32>
    %116 = tpu.matmul %114, %115, %cst_80 {dimension_numbers = #tpu.dot_dimension_numbers<[1], [0], [0], [1], [0, 0, 1, 1], [], []>} : vector<2x8xf32>, vector<8x128xf32>, vector<2x128xf32> -> vector<2x128xf32>
    %117 = vector.extract_strided_slice %116 {offsets = [0, 0], sizes = [1, 128], strides = [1, 1]} : vector<2x128xf32> to vector<1x128xf32>
    %118 = vector.broadcast %117 : vector<1x128xf32> to vector<32x128xf32>
    %119 = arith.mulf %91, %118 : vector<32x128xf32>
    %120 = vector.extract_strided_slice %116 {offsets = [1, 0], sizes = [1, 128], strides = [1, 1]} : vector<2x128xf32> to vector<1x128xf32>
    %121 = vector.broadcast %120 : vector<1x128xf32> to vector<32x128xf32>
    %122 = arith.addf %119, %121 : vector<32x128xf32>
    %cst_81 = arith.constant 0.000000e+00 : f32
    %123 = vector.broadcast %cst_81 : f32 to vector<32x128xf32>
    %124 = arith.maximumf %122, %123 : vector<32x128xf32>
    %c0_82 = arith.constant 0 : index
    %c0_83 = arith.constant 0 : index
    %125 = vector.load %arg9[%c0_82, %c0_83] : memref<32x128xf32, #tpu.memory_space<vmem>>, vector<32x128xf32>
    tpu.vector_store %arg9[%c0_82, %c0_83], %124 {strides = array<i32>} : memref<32x128xf32, #tpu.memory_space<vmem>>, vector<32x128xf32>,
    return
  }
}

</mosaic_0001>

<llo_original>
// kernel: double_conv.1
$region0: #{double_conv.1}
  #allocation0 [shape = 'u32[]', space=smem, size = 0x4, offset = 0x4, fixed_abs, tag = 'smem constant byte address 0x4 - core index']
  #allocation1 [shape = 'u32[144,128]{1,0:T(1,128)}', space=vmem, size = 0x12000, scoped, tag = 'internal scratch']
  #allocation2 [shape = 'f32[2,18,64]{2,1,0:T(8,128)}', space=vmem, size = 0x6000, scoped, tag = 'scratch operand']
  #allocation3 [shape = 'f32[2,18,128]{2,1,0:T(8,128)}', space=vmem, size = 0x6000, scoped, tag = 'scratch operand']
  %s0 = inlined_call_operand.vmem [shape: bf16[2,16,64], index: 0, kind: input, shape index: {}]
  %s1 = inlined_call_operand.vmem [shape: bf16[3,64,128], index: 1, kind: input, shape index: {}]
  %s2 = inlined_call_operand.vmem [shape: f32[1,8], index: 2, kind: input, shape index: {}]
  %s3 = inlined_call_operand.vmem [shape: f32[1,8], index: 3, kind: input, shape index: {}]
  %s4 = inlined_call_operand.vmem [shape: bf16[3,128,128], index: 4, kind: input, shape index: {}]
  %s5 = inlined_call_operand.vmem [shape: f32[1,8], index: 5, kind: input, shape index: {}]
  %s6 = inlined_call_operand.vmem [shape: f32[1,8], index: 6, kind: input, shape index: {}]
  %s7 = inlined_call_operand.vmem [shape: f32[128,8], index: 7, kind: input, shape index: {}]
  %s8 = inlined_call_operand.vmem [shape: f32[8,128], index: 8, kind: input, shape index: {}]
  %s9 = inlined_call_operand.vmem [shape: f32[32,128], index: 9, kind: output, shape index: {}]
  %s10 = sld [smem:[#allocation0]]
  $region46: #{double_conv.1} parent=0
    _
  %s12 = ssub.s32 1, %s10
  %s13 = scalar_select 0, %s12, %s10
  // Predicated region
  $region2: #{double_conv.1} parent=0 // pred_check
    _
  $region3: #{double_conv.1} parent=0 // pred_check_branch
    %15 = sbr.rel (0) target = $region5
  $region4: #{double_conv.1} parent=0 // pred_region
    _
  $region5: #{double_conv.1} parent=0 // pred_fallthru
    _
  // Predicated region
  $region6: #{double_conv.1} parent=0 // pred_check
    _
  $region7: #{double_conv.1} parent=0 // pred_check_branch
    %17 = sbr.rel (0) target = $region9
  $region8: #{double_conv.1} parent=0 // pred_region
    _
  $region9: #{double_conv.1} parent=0 // pred_fallthru
    _
  // Predicated region
  $region10: #{double_conv.1} parent=0 // pred_check
    _
  $region11: #{double_conv.1} parent=0 // pred_check_branch
    %19 = sbr.rel (0) target = $region13
  $region12: #{double_conv.1} parent=0 // pred_region
    _
  $region13: #{double_conv.1} parent=0 // pred_fallthru
    _
  // Predicated region
  $region14: #{double_conv.1} parent=0 // pred_check
    _
  $region15: #{double_conv.1} parent=0 // pred_check_branch
    %21 = sbr.rel (0) target = $region17
  $region16: #{double_conv.1} parent=0 // pred_region
    _
  $region17: #{double_conv.1} parent=0 // pred_fallthru
    _
  // Predicated region
  $region18: #{double_conv.1} parent=0 // pred_check
    _
  $region19: #{double_conv.1} parent=0 // pred_check_branch
    %23 = sbr.rel (0) target = $region21
  $region20: #{double_conv.1} parent=0 // pred_region
    _
  $region21: #{double_conv.1} parent=0 // pred_fallthru
    _
  // Predicated region
  $region22: #{double_conv.1} parent=0 // pred_check
    _
  $region23: #{double_conv.1} parent=0 // pred_check_branch
    %25 = sbr.rel (0) target = $region25
  $region24: #{double_conv.1} parent=0 // pred_region
    _
  $region25: #{double_conv.1} parent=0 // pred_fallthru
    _
  // Predicated region
  $region26: #{double_conv.1} parent=0 // pred_check
    _
  $region27: #{double_conv.1} parent=0 // pred_check_branch
    %27 = sbr.rel (0) target = $region29
  $region28: #{double_conv.1} parent=0 // pred_region
    _
  $region29: #{double_conv.1} parent=0 // pred_fallthru
    _
  // Predicated region
  $region30: #{double_conv.1} parent=0 // pred_check
    _
  $region31: #{double_conv.1} parent=0 // pred_check_branch
    %29 = sbr.rel (0) target = $region33
  $region32: #{double_conv.1} parent=0 // pred_region
    _
  $region33: #{double_conv.1} parent=0 // pred_fallthru
    _
  // Predicated region
  $region34: #{double_conv.1} parent=0 // pred_check
    _
  $region35: #{double_conv.1} parent=0 // pred_check_branch
    %31 = sbr.rel (0) target = $region37
  $region36: #{double_conv.1} parent=0 // pred_region
    _
  $region37: #{double_conv.1} parent=0 // pred_fallthru
    _
  %vm33 = vcmask 516096
  %34 = vst.msk [vmem:[#allocation2] sm:$0x1] %vm33, 0.0
  %35 = vst.msk [vmem:[#allocation2 + $0x18] sm:$0x1] %vm33, 0.0
  %36 = vst.msk [vmem:[#allocation2 + $0x11] sm:$0x1] %vm33, 0.0
  %37 = vst.msk [vmem:[#allocation2 + $0x29] sm:$0x1] %vm33, 0.0
  %v38 = vld [vmem:[%s0] sm:$0xf]
  %v39 = vld [vmem:[%s0 + $0x4] sm:$0xf]
  %v40 = vld [vmem:[%s0 + $0x8] sm:$0xf]
  %v41 = vld [vmem:[%s0 + $0xc] sm:$0xf]
  %v42 = vunpack.c.l.bf16 %v38
  %v43 = vunpack.c.l.bf16 %v39
  %v44 = vunpack.c.l.bf16 %v40
  %v45 = vunpack.c.l.bf16 %v41
  %vm46 = vcmask 523264
  %47 = vst.msk [vmem:[#allocation2 + $0x1] sm:$0xff] %vm46, %v42
  %48 = vst.msk [vmem:[#allocation2 + $0x9] sm:$0xff] %vm46, %v43
  %49 = vst.msk [vmem:[#allocation2 + $0x19] sm:$0xff] %vm46, %v44
  %50 = vst.msk [vmem:[#allocation2 + $0x21] sm:$0xff] %vm46, %v45
  %v51 = vld [vmem:[#allocation2] sm:$0xff]
  %v52 = vld [vmem:[#allocation2 + $0x8] sm:$0xff]
  %v53 = vld [vmem:[#allocation2 + $0x10] sm:$0x3]
  %v54 = vld [vmem:[#allocation2 + $0x18] sm:$0xff]
  %v55 = vld [vmem:[#allocation2 + $0x20] sm:$0xff]
  %v56 = vld [vmem:[#allocation2 + $0x28] sm:$0x3]
  %v57 = vpack.c.bf16 %v52, %v51
  %v58 = vpack.c.bf16 %v55, %v54
  %v59 = vld [vmem:[%s1] sm:$0xf]
  %v60 = vld [vmem:[%s1 + $0x4] sm:$0xf]
  %v61 = vld [vmem:[%s1 + $0x8] sm:$0xf]
  %v62 = vld [vmem:[%s1 + $0xc] sm:$0xf]
  %v63 = vld [vmem:[%s1 + $0x10] sm:$0xf]
  %v64 = vld [vmem:[%s1 + $0x14] sm:$0xf]
  %v65 = vld [vmem:[%s1 + $0x18] sm:$0xf]
  %v66 = vld [vmem:[%s1 + $0x1c] sm:$0xf]
  %vm73 = vcmask 1046528
  %v74 = vrot.slane %v51, 1
  %v75 = vrot.slane %v52, 1
  %v76 = vsel %vm73, %v74, %v75
  %v77 = vrot.slane %v53, 1
  %v78 = vsel %vm73, %v75, %v77
  %v79 = vrot.slane %v54, 1
  %v80 = vrot.slane %v55, 1
  %v81 = vsel %vm73, %v79, %v80
  %v82 = vrot.slane %v56, 1
  %v83 = vsel %vm73, %v80, %v82
  %v88 = vpack.c.bf16 %v78, %v76
  %v89 = vpack.c.bf16 %v83, %v81
  %s90 = scalar_lea.vmem %s1, 32
  %v91 = vld [vmem:[%s90] sm:$0xf]
  %v92 = vld [vmem:[%s90 + $0x4] sm:$0xf]
  %v93 = vld [vmem:[%s90 + $0x8] sm:$0xf]
  %v94 = vld [vmem:[%s90 + $0xc] sm:$0xf]
  %v95 = vld [vmem:[%s90 + $0x10] sm:$0xf]
  %v96 = vld [vmem:[%s90 + $0x14] sm:$0xf]
  %v97 = vld [vmem:[%s90 + $0x18] sm:$0xf]
  %v98 = vld [vmem:[%s90 + $0x1c] sm:$0xf]
  %v107 = vunpack.c.l.b16 %v91
  %v108 = vunpack.c.l.b16 %v92
  %v109 = vunpack.c.l.b16 %v93
  %v110 = vunpack.c.l.b16 %v94
  %v111 = vunpack.c.l.b16 %v95
  %v112 = vunpack.c.l.b16 %v96
  %v113 = vunpack.c.l.b16 %v97
  %v114 = vunpack.c.l.b16 %v98
  %v115 = vpack.c.b16 %v108, %v107
  %v116 = vpack.c.b16 %v110, %v109
  %v117 = vpack.c.b16 %v112, %v111
  %v118 = vpack.c.b16 %v114, %v113
  %v124 = vsel %vm46, %v88, 0
  %v127 = vsel %vm46, %v89, 0
  %129 = vmatprep.subr.bf16.mxu0 0
  %130 = vmatpush1.bf16.msra.mxu0 %v115
  %131 = vmatprep.subr.bf16.mxu0 0
  %132 = vmatpush1.bf16.msra.mxu0 %v116
  %133 = vmatprep.subr.bf16.mxu0 0
  %134 = vmatpush1.bf16.msra.mxu0 %v117
  %135 = vmatprep.subr.bf16.mxu0 0
  %136 = vmatpush1.bf16.msra.mxu0 %v118
  %137 = vmatprep.subr.bf16.mxu0 0
  %138 = vmatpush1.bf16.msra.mxu0 0
  %139 = vmatprep.subr.bf16.mxu0 0
  %140 = vmatpush1.bf16.msra.mxu0 0
  %141 = vmatprep.subr.bf16.mxu0 0
  %142 = vmatpush1.bf16.msra.mxu0 0
  %143 = vmatprep.subr.bf16.mxu0 0
  %144 = vmatpush1.bf16.msra.mxu0 0
  %145 = vmatprep.subr.bf16.mxu0 0
  %146 = vmatpush1.bf16.msra.mxu0 0
  %147 = vmatprep.subr.bf16.mxu0 0
  %148 = vmatpush1.bf16.msra.mxu0 0
  %149 = vmatprep.subr.bf16.mxu0 0
  %150 = vmatpush1.bf16.msra.mxu0 0
  %151 = vmatprep.subr.bf16.mxu0 0
  %152 = vmatpush1.bf16.msra.mxu0 0
  %153 = vmatprep.subr.bf16.mxu0 0
  %154 = vmatpush1.bf16.msra.mxu0 0
  %155 = vmatprep.subr.bf16.mxu0 0
  %156 = vmatpush1.bf16.msra.mxu0 0
  %157 = vmatprep.subr.bf16.mxu0 0
  %158 = vmatpush1.bf16.msra.mxu0 0
  %159 = vmatprep.subr.bf16.mxu0 0
  %160 = vmatpush1.bf16.msra.mxu0 0
  %161 = vmatprep.mubr.bf16.mxu0 0
  %162 = vmatmul.mubr.bf16.gmra.mrb[0].mxu0 %v124
  %v163 = vpop.f32.mrb[0].mxu0
  %v164 = vadd.f32 0.0, %v163
  %v165 = vpop.f32.mrb[0].mxu0
  %v166 = vpop.f32.mrb[0].mxu0
  %v167 = vadd.f32 0.0, %v166
  %v168 = vpop.f32.mrb[0].mxu0
  %169 = vmatprep.mubr.bf16.mxu0 0
  %170 = vmatmul.mubr.bf16.gmra.mrb[0].mxu0 %v127
  %v171 = vpop.f32.mrb[0].mxu0
  %v172 = vadd.f32 0.0, %v171
  %v173 = vpop.f32.mrb[0].mxu0
  %v174 = vpop.f32.mrb[0].mxu0
  %v175 = vadd.f32 0.0, %v174
  %v176 = vpop.f32.mrb[0].mxu0
  %177 = vdwg.mxu0
  %v186 = vunpack.c.l.b16 %v59
  %v187 = vunpack.c.l.b16 %v60
  %v188 = vunpack.c.l.b16 %v61
  %v189 = vunpack.c.l.b16 %v62
  %v190 = vunpack.c.l.b16 %v63
  %v191 = vunpack.c.l.b16 %v64
  %v192 = vunpack.c.l.b16 %v65
  %v193 = vunpack.c.l.b16 %v66
  %v194 = vpack.c.b16 %v187, %v186
  %v195 = vpack.c.b16 %v189, %v188
  %v196 = vpack.c.b16 %v191, %v190
  %v197 = vpack.c.b16 %v193, %v192
  %v203 = vsel %vm46, %v57, 0
  %v206 = vsel %vm46, %v58, 0
  %208 = vmatprep.subr.bf16.mxu0 0
  %209 = vmatpush1.bf16.msra.mxu0 %v194
  %210 = vmatprep.subr.bf16.mxu0 0
  %211 = vmatpush1.bf16.msra.mxu0 %v195
  %212 = vmatprep.subr.bf16.mxu0 0
  %213 = vmatpush1.bf16.msra.mxu0 %v196
  %214 = vmatprep.subr.bf16.mxu0 0
  %215 = vmatpush1.bf16.msra.mxu0 %v197
  %216 = vmatprep.subr.bf16.mxu0 0
  %217 = vmatpush1.bf16.msra.mxu0 0
  %218 = vmatprep.subr.bf16.mxu0 0
  %219 = vmatpush1.bf16.msra.mxu0 0
  %220 = vmatprep.subr.bf16.mxu0 0
  %221 = vmatpush1.bf16.msra.mxu0 0
  %222 = vmatprep.subr.bf16.mxu0 0
  %223 = vmatpush1.bf16.msra.mxu0 0
  %224 = vmatprep.subr.bf16.mxu0 0
  %225 = vmatpush1.bf16.msra.mxu0 0
  %226 = vmatprep.subr.bf16.mxu0 0
  %227 = vmatpush1.bf16.msra.mxu0 0
  %228 = vmatprep.subr.bf16.mxu0 0
  %229 = vmatpush1.bf16.msra.mxu0 0
  %230 = vmatprep.subr.bf16.mxu0 0
  %231 = vmatpush1.bf16.msra.mxu0 0
  %232 = vmatprep.subr.bf16.mxu0 0
  %233 = vmatpush1.bf16.msra.mxu0 0
  %234 = vmatprep.subr.bf16.mxu0 0
  %235 = vmatpush1.bf16.msra.mxu0 0
  %236 = vmatprep.subr.bf16.mxu0 0
  %237 = vmatpush1.bf16.msra.mxu0 0
  %238 = vmatprep.subr.bf16.mxu0 0
  %239 = vmatpush1.bf16.msra.mxu0 0
  %240 = vmatprep.mubr.bf16.mxu0 0
  %241 = vmatmul.mubr.bf16.gmra.mrb[0].mxu0 %v203
  %v242 = vpop.f32.mrb[0].mxu0
  %v243 = vadd.f32 %v164, %v242
  %v244 = vpop.f32.mrb[0].mxu0
  %v245 = vpop.f32.mrb[0].mxu0
  %v246 = vadd.f32 %v167, %v245
  %v247 = vpop.f32.mrb[0].mxu0
  %248 = vmatprep.mubr.bf16.mxu0 0
  %249 = vmatmul.mubr.bf16.gmra.mrb[0].mxu0 %v206
  %v250 = vpop.f32.mrb[0].mxu0
  %v251 = vadd.f32 %v172, %v250
  %v252 = vpop.f32.mrb[0].mxu0
  %v253 = vpop.f32.mrb[0].mxu0
  %v254 = vadd.f32 %v175, %v253
  %v255 = vpop.f32.mrb[0].mxu0
  %256 = vdwg.mxu0
  %vm257 = vcmask 1045504
  %v258 = vrot.slane %v51, 2
  %v259 = vrot.slane %v52, 2
  %v260 = vsel %vm257, %v258, %v259
  %v261 = vrot.slane %v53, 2
  %v262 = vsel %vm257, %v259, %v261
  %v263 = vrot.slane %v54, 2
  %v264 = vrot.slane %v55, 2
  %v265 = vsel %vm257, %v263, %v264
  %v266 = vrot.slane %v56, 2
  %v267 = vsel %vm257, %v264, %v266
  %v272 = vpack.c.bf16 %v262, %v260
  %v273 = vpack.c.bf16 %v267, %v265
  %s274 = scalar_lea.vmem %s1, 64
  %v275 = vld [vmem:[%s274] sm:$0xf]
  %v276 = vld [vmem:[%s274 + $0x4] sm:$0xf]
  %v277 = vld [vmem:[%s274 + $0x8] sm:$0xf]
  %v278 = vld [vmem:[%s274 + $0xc] sm:$0xf]
  %v279 = vld [vmem:[%s274 + $0x10] sm:$0xf]
  %v280 = vld [vmem:[%s274 + $0x14] sm:$0xf]
  %v281 = vld [vmem:[%s274 + $0x18] sm:$0xf]
  %v282 = vld [vmem:[%s274 + $0x1c] sm:$0xf]
  %v291 = vunpack.c.l.b16 %v275
  %v292 = vunpack.c.l.b16 %v276
  %v293 = vunpack.c.l.b16 %v277
  %v294 = vunpack.c.l.b16 %v278
  %v295 = vunpack.c.l.b16 %v279
  %v296 = vunpack.c.l.b16 %v280
  %v297 = vunpack.c.l.b16 %v281
  %v298 = vunpack.c.l.b16 %v282
  %v299 = vpack.c.b16 %v292, %v291
  %v300 = vpack.c.b16 %v294, %v293
  %v301 = vpack.c.b16 %v296, %v295
  %v302 = vpack.c.b16 %v298, %v297
  %v308 = vsel %vm46, %v272, 0
  %v311 = vsel %vm46, %v273, 0
  %313 = vmatprep.subr.bf16.mxu0 0
  %314 = vmatpush1.bf16.msra.mxu0 %v299
  %315 = vmatprep.subr.bf16.mxu0 0
  %316 = vmatpush1.bf16.msra.mxu0 %v300
  %317 = vmatprep.subr.bf16.mxu0 0
  %318 = vmatpush1.bf16.msra.mxu0 %v301
  %319 = vmatprep.subr.bf16.mxu0 0
  %320 = vmatpush1.bf16.msra.mxu0 %v302
  %321 = vmatprep.subr.bf16.mxu0 0
  %322 = vmatpush1.bf16.msra.mxu0 0
  %323 = vmatprep.subr.bf16.mxu0 0
  %324 = vmatpush1.bf16.msra.mxu0 0
  %325 = vmatprep.subr.bf16.mxu0 0
  %326 = vmatpush1.bf16.msra.mxu0 0
  %327 = vmatprep.subr.bf16.mxu0 0
  %328 = vmatpush1.bf16.msra.mxu0 0
  %329 = vmatprep.subr.bf16.mxu0 0
  %330 = vmatpush1.bf16.msra.mxu0 0
  %331 = vmatprep.subr.bf16.mxu0 0
  %332 = vmatpush1.bf16.msra.mxu0 0
  %333 = vmatprep.subr.bf16.mxu0 0
  %334 = vmatpush1.bf16.msra.mxu0 0
  %335 = vmatprep.subr.bf16.mxu0 0
  %336 = vmatpush1.bf16.msra.mxu0 0
  %337 = vmatprep.subr.bf16.mxu0 0
  %338 = vmatpush1.bf16.msra.mxu0 0
  %339 = vmatprep.subr.bf16.mxu0 0
  %340 = vmatpush1.bf16.msra.mxu0 0
  %341 = vmatprep.subr.bf16.mxu0 0
  %342 = vmatpush1.bf16.msra.mxu0 0
  %343 = vmatprep.subr.bf16.mxu0 0
  %344 = vmatpush1.bf16.msra.mxu0 0
  %345 = vmatprep.mubr.bf16.mxu0 0
  %346 = vmatmul.mubr.bf16.gmra.mrb[0].mxu0 %v308
  %v347 = vpop.f32.mrb[0].mxu0
  %v348 = vadd.f32 0.0, %v347
  %v349 = vpop.f32.mrb[0].mxu0
  %v350 = vpop.f32.mrb[0].mxu0
  %v351 = vadd.f32 0.0, %v350
  %v352 = vpop.f32.mrb[0].mxu0
  %353 = vmatprep.mubr.bf16.mxu0 0
  %354 = vmatmul.mubr.bf16.gmra.mrb[0].mxu0 %v311
  %v355 = vpop.f32.mrb[0].mxu0
  %v356 = vadd.f32 0.0, %v355
  %v357 = vpop.f32.mrb[0].mxu0
  %v358 = vpop.f32.mrb[0].mxu0
  %v359 = vadd.f32 0.0, %v358
  %v360 = vpop.f32.mrb[0].mxu0
  %361 = vdwg.mxu0
  %v362 = vadd.f32 %v243, %v348
  %v363 = vadd.f32 %v246, %v351
  %v364 = vadd.f32 %v251, %v356
  %v365 = vadd.f32 %v254, %v359
  %v366 = vadd.f32 %v362, %v363
  %v367 = vadd.f32 %v366, %v364
  %v368 = vadd.f32 %v367, %v365
  %v369 = vrot.slane %v368, 4
  %v370 = vadd.f32 %v368, %v369
  %v371 = vrot.slane %v370, 2
  %v372 = vadd.f32 %v370, %v371
  %v373 = vrot.slane %v372, 1
  %v374 = vadd.f32 %v372, %v373
  %v375 = vmul.f32 %v362, %v362
  %v376 = vmul.f32 %v363, %v363
  %v377 = vmul.f32 %v364, %v364
  %v378 = vmul.f32 %v365, %v365
  %v379 = vadd.f32 %v375, %v376
  %v380 = vadd.f32 %v379, %v377
  %v381 = vadd.f32 %v380, %v378
  %v382 = vrot.slane %v381, 4
  %v383 = vadd.f32 %v381, %v382
  %v384 = vrot.slane %v383, 2
  %v385 = vadd.f32 %v383, %v384
  %v386 = vrot.slane %v385, 1
  %v387 = vadd.f32 %v385, %v386
  %vm388 = vcmask 1040384
  %v389 = vsel %vm388, %v374, %v387
  %v390 = vld [vmem:[%s7] sm:$0xff]
  %v391 = vld [vmem:[%s7 + $0x8] sm:$0xff]
  %v392 = vld [vmem:[%s7 + $0x10] sm:$0xff]
  %v393 = vld [vmem:[%s7 + $0x18] sm:$0xff]
  %v394 = vld [vmem:[%s7 + $0x20] sm:$0xff]
  %v395 = vld [vmem:[%s7 + $0x28] sm:$0xff]
  %v396 = vld [vmem:[%s7 + $0x30] sm:$0xff]
  %v397 = vld [vmem:[%s7 + $0x38] sm:$0xff]
  %v398 = vld [vmem:[%s7 + $0x40] sm:$0xff]
  %v399 = vld [vmem:[%s7 + $0x48] sm:$0xff]
  %v400 = vld [vmem:[%s7 + $0x50] sm:$0xff]
  %v401 = vld [vmem:[%s7 + $0x58] sm:$0xff]
  %v402 = vld [vmem:[%s7 + $0x60] sm:$0xff]
  %v403 = vld [vmem:[%s7 + $0x68] sm:$0xff]
  %v404 = vld [vmem:[%s7 + $0x70] sm:$0xff]
  %v405 = vld [vmem:[%s7 + $0x78] sm:$0xff]
  %406 = vmatprep.subr.mxu0 0.0
  %407 = vmatpush1.msra.mxu0 %v390
  %408 = vmatprep.subr.mxu0 0.0
  %409 = vmatpush1.msra.mxu0 %v391
  %410 = vmatprep.subr.mxu0 0.0
  %411 = vmatpush1.msra.mxu0 %v392
  %412 = vmatprep.subr.mxu0 0.0
  %413 = vmatpush1.msra.mxu0 %v393
  %414 = vmatprep.subr.mxu0 0.0
  %415 = vmatpush1.msra.mxu0 %v394
  %416 = vmatprep.subr.mxu0 0.0
  %417 = vmatpush1.msra.mxu0 %v395
  %418 = vmatprep.subr.mxu0 0.0
  %419 = vmatpush1.msra.mxu0 %v396
  %420 = vmatprep.subr.mxu0 0.0
  %421 = vmatpush1.msra.mxu0 %v397
  %422 = vmatprep.subr.mxu0 0.0
  %423 = vmatpush1.msra.mxu0 %v398
  %424 = vmatprep.subr.mxu0 0.0
  %425 = vmatpush1.msra.mxu0 %v399
  %426 = vmatprep.subr.mxu0 0.0
  %427 = vmatpush1.msra.mxu0 %v400
  %428 = vmatprep.subr.mxu0 0.0
  %429 = vmatpush1.msra.mxu0 %v401
  %430 = vmatprep.subr.mxu0 0.0
  %431 = vmatpush1.msra.mxu0 %v402
  %432 = vmatprep.subr.mxu0 0.0
  %433 = vmatpush1.msra.mxu0 %v403
  %434 = vmatprep.subr.mxu0 0.0
  %435 = vmatpush1.msra.mxu0 %v404
  %436 = vmatprep.subr.mxu0 0.0
  %437 = vmatpush1.msra.mxu0 %v405
  %438 = vmatprep.subr.mxu0 0.0
  %439 = vmatpush1.msra.mxu0 0.0
  %440 = vmatprep.subr.mxu0 0.0
  %441 = vmatpush1.msra.mxu0 0.0
  %442 = vmatprep.subr.mxu0 0.0
  %443 = vmatpush1.msra.mxu0 0.0
  %444 = vmatprep.subr.mxu0 0.0
  %445 = vmatpush1.msra.mxu0 0.0
  %446 = vmatprep.subr.mxu0 0.0
  %447 = vmatpush1.msra.mxu0 0.0
  %448 = vmatprep.subr.mxu0 0.0
  %449 = vmatpush1.msra.mxu0 0.0
  %450 = vmatprep.subr.mxu0 0.0
  %451 = vmatpush1.msra.mxu0 0.0
  %452 = vmatprep.subr.mxu0 0.0
  %453 = vmatpush1.msra.mxu0 0.0
  %454 = vmatprep.subr.mxu0 0.0
  %455 = vmatpush1.msra.mxu0 0.0
  %456 = vmatprep.subr.mxu0 0.0
  %457 = vmatpush1.msra.mxu0 0.0
  %458 = vmatprep.subr.mxu0 0.0
  %459 = vmatpush1.msra.mxu0 0.0
  %460 = vmatprep.subr.mxu0 0.0
  %461 = vmatpush1.msra.mxu0 0.0
  %462 = vmatprep.subr.mxu0 0.0
  %463 = vmatpush1.msra.mxu0 0.0
  %464 = vmatprep.subr.mxu0 0.0
  %465 = vmatpush1.msra.mxu0 0.0
  %466 = vmatprep.subr.mxu0 0.0
  %467 = vmatpush1.msra.mxu0 0.0
  %468 = vmatprep.subr.mxu0 0.0
  %469 = vmatpush1.msra.mxu0 0.0
  %470 = vmatprep.mubr.f32.mxu0 0.0
  %471 = vmatmul.mubr.f32.gmra.mrb[0].mxu0 %v389
  %v472 = vpop.f32.mrb[0].mxu0
  %v473 = vadd.f32 0.0, %v472
  %v474 = vpop.f32.mrb[0].mxu0
  %475 = vdwg.mxu0
  %v476 = vmul.f32 %v473, %v473
  %v478 = vrot.slane %v476, 7
  %v480 = vsub.f32 %v473, %v478
  %v481 = vmax.f32 %v480, 0.0
  %v482 = vld [vmem:[%s2] sm:$0x1]
  %v483 = vadd.f32 %v481, 1e-05
  %v484 = vrsqrt.pop %v483
  %v487 = vunpack.c.l.s4 1966171168
  %v488 = vunpack.c.0.s8 %v487
  %v489 = vlaneseq
  %v490 = vshrl.u32 %v489, 7
  %v491 = vsub.s32 %v488, %v490
  %v492 = vrot.slane %v484, %v491
  %v493 = vcombine.high %v492, %v492
  %v495 = vunpack.c.l.s4 1966171168
  %v496 = vunpack.c.0.s8 %v495
  %v497 = vlaneseq
  %v498 = vshrl.u32 %v497, 7
  %v499 = vsub.s32 %v496, %v498
  %v500 = vrot.slane %v493, %v499
  %v502 = vmul.f32 %v482, %v500
  %v503 = vld [vmem:[%s3] sm:$0x1]
  %v504 = vmul.f32 %v473, %v502
  %v505 = vsub.f32 %v503, %v504
  %v507 = vlaneseq
  %v508 = vshrl.u32 %v507, 7
  %v509 = vsub.s32 0, %v508
  %v510 = vrot.slane %v505, %v509
  %v512 = vsel %vm388, %v502, %v510
  %v513 = vld [vmem:[%s8] sm:$0xff]
  %vm514 = vcmask 64512
  %v516 = vsel %vm514, %v512, 0
  %518 = vmatprep.subr.mxu0 0.0
  %519 = vmatpush1.msra.mxu0 %v513
  %520 = vmatprep.subr.mxu0 0.0
  %521 = vmatpush1.msra.mxu0 0.0
  %522 = vmatprep.subr.mxu0 0.0
  %523 = vmatpush1.msra.mxu0 0.0
  %524 = vmatprep.subr.mxu0 0.0
  %525 = vmatpush1.msra.mxu0 0.0
  %526 = vmatprep.subr.mxu0 0.0
  %527 = vmatpush1.msra.mxu0 0.0
  %528 = vmatprep.subr.mxu0 0.0
  %529 = vmatpush1.msra.mxu0 0.0
  %530 = vmatprep.subr.mxu0 0.0
  %531 = vmatpush1.msra.mxu0 0.0
  %532 = vmatprep.subr.mxu0 0.0
  %533 = vmatpush1.msra.mxu0 0.0
  %534 = vmatprep.subr.mxu0 0.0
  %535 = vmatpush1.msra.mxu0 0.0
  %536 = vmatprep.subr.mxu0 0.0
  %537 = vmatpush1.msra.mxu0 0.0
  %538 = vmatprep.subr.mxu0 0.0
  %539 = vmatpush1.msra.mxu0 0.0
  %540 = vmatprep.subr.mxu0 0.0
  %541 = vmatpush1.msra.mxu0 0.0
  %542 = vmatprep.subr.mxu0 0.0
  %543 = vmatpush1.msra.mxu0 0.0
  %544 = vmatprep.subr.mxu0 0.0
  %545 = vmatpush1.msra.mxu0 0.0
  %546 = vmatprep.subr.mxu0 0.0
  %547 = vmatpush1.msra.mxu0 0.0
  %548 = vmatprep.subr.mxu0 0.0
  %549 = vmatpush1.msra.mxu0 0.0
  %550 = vmatprep.subr.mxu0 0.0
  %551 = vmatpush1.msra.mxu0 0.0
  %552 = vmatprep.subr.mxu0 0.0
  %553 = vmatpush1.msra.mxu0 0.0
  %554 = vmatprep.subr.mxu0 0.0
  %555 = vmatpush1.msra.mxu0 0.0
  %556 = vmatprep.subr.mxu0 0.0
  %557 = vmatpush1.msra.mxu0 0.0
  %558 = vmatprep.subr.mxu0 0.0
  %559 = vmatpush1.msra.mxu0 0.0
  %560 = vmatprep.subr.mxu0 0.0
  %561 = vmatpush1.msra.mxu0 0.0
  %562 = vmatprep.subr.mxu0 0.0
  %563 = vmatpush1.msra.mxu0 0.0
  %564 = vmatprep.subr.mxu0 0.0
  %565 = vmatpush1.msra.mxu0 0.0
  %566 = vmatprep.subr.mxu0 0.0
  %567 = vmatpush1.msra.mxu0 0.0
  %568 = vmatprep.subr.mxu0 0.0
  %569 = vmatpush1.msra.mxu0 0.0
  %570 = vmatprep.subr.mxu0 0.0
  %571 = vmatpush1.msra.mxu0 0.0
  %572 = vmatprep.subr.mxu0 0.0
  %573 = vmatpush1.msra.mxu0 0.0
  %574 = vmatprep.subr.mxu0 0.0
  %575 = vmatpush1.msra.mxu0 0.0
  %576 = vmatprep.subr.mxu0 0.0
  %577 = vmatpush1.msra.mxu0 0.0
  %578 = vmatprep.subr.mxu0 0.0
  %579 = vmatpush1.msra.mxu0 0.0
  %580 = vmatprep.subr.mxu0 0.0
  %581 = vmatpush1.msra.mxu0 0.0
  %582 = vmatprep.mubr.f32.mxu0 0.0
  %583 = vmatmul.mubr.f32.gmra.mrb[0].mxu0 %v516
  %v584 = vpop.f32.mrb[0].mxu0
  %v585 = vadd.f32 0.0, %v584
  %v586 = vpop.f32.mrb[0].mxu0
  %587 = vdwg.mxu0
  %v588 = vlaneseq
  %v589 = vshrl.u32 %v588, 7
  %v590 = vsub.s32 0, %v589
  %v591 = vrot.slane %v585, %v590
  %v592 = vmul.f32 %v362, %v591
  %v593 = vmul.f32 %v363, %v591
  %v594 = vmul.f32 %v364, %v591
  %v595 = vmul.f32 %v365, %v591
  %v596 = vlaneseq
  %v597 = vshrl.u32 %v596, 7
  %v598 = vsub.s32 1, %v597
  %v599 = vrot.slane %v585, %v598
  %v600 = vadd.f32 %v592, %v599
  %v601 = vadd.f32 %v593, %v599
  %v602 = vadd.f32 %v594, %v599
  %v603 = vadd.f32 %v595, %v599
  %v604 = vmax.f32 %v600, 0.0
  %v605 = vmax.f32 %v601, 0.0
  %v606 = vmax.f32 %v602, 0.0
  %v607 = vmax.f32 %v603, 0.0
  %608 = vst [vmem:[#allocation3] sm:$0x1] 0.0
  %609 = vst [vmem:[#allocation3 + $0x18] sm:$0x1] 0.0
  %610 = vst [vmem:[#allocation3 + $0x11] sm:$0x1] 0.0
  %611 = vst [vmem:[#allocation3 + $0x29] sm:$0x1] 0.0
  %612 = vst [vmem:[#allocation3 + $0x1] sm:$0xff] %v604
  %613 = vst [vmem:[#allocation3 + $0x9] sm:$0xff] %v605
  %614 = vst [vmem:[#allocation3 + $0x19] sm:$0xff] %v606
  %615 = vst [vmem:[#allocation3 + $0x21] sm:$0xff] %v607
  %v616 = vld [vmem:[#allocation3] sm:$0xff]
  %v617 = vld [vmem:[#allocation3 + $0x8] sm:$0xff]
  %v618 = vld [vmem:[#allocation3 + $0x10] sm:$0x3]
  %v619 = vld [vmem:[#allocation3 + $0x18] sm:$0xff]
  %v620 = vld [vmem:[#allocation3 + $0x20] sm:$0xff]
  %v621 = vld [vmem:[#allocation3 + $0x28] sm:$0x3]
  %v622 = vpack.c.bf16 %v617, %v616
  %v623 = vpack.c.bf16 %v620, %v619
  %v624 = vld [vmem:[%s4] sm:$0xf]
  %v625 = vld [vmem:[%s4 + $0x4] sm:$0xf]
  %v626 = vld [vmem:[%s4 + $0x8] sm:$0xf]
  %v627 = vld [vmem:[%s4 + $0xc] sm:$0xf]
  %v628 = vld [vmem:[%s4 + $0x10] sm:$0xf]
  %v629 = vld [vmem:[%s4 + $0x14] sm:$0xf]
  %v630 = vld [vmem:[%s4 + $0x18] sm:$0xf]
  %v631 = vld [vmem:[%s4 + $0x1c] sm:$0xf]
  %v632 = vld [vmem:[%s4 + $0x20] sm:$0xf]
  %v633 = vld [vmem:[%s4 + $0x24] sm:$0xf]
  %v634 = vld [vmem:[%s4 + $0x28] sm:$0xf]
  %v635 = vld [vmem:[%s4 + $0x2c] sm:$0xf]
  %v636 = vld [vmem:[%s4 + $0x30] sm:$0xf]
  %v637 = vld [vmem:[%s4 + $0x34] sm:$0xf]
  %v638 = vld [vmem:[%s4 + $0x38] sm:$0xf]
  %v639 = vld [vmem:[%s4 + $0x3c] sm:$0xf]
  %v646 = vrot.slane %v616, 1
  %v647 = vrot.slane %v617, 1
  %v648 = vsel %vm73, %v646, %v647
  %v649 = vrot.slane %v618, 1
  %v650 = vsel %vm73, %v647, %v649
  %v651 = vrot.slane %v619, 1
  %v652 = vrot.slane %v620, 1
  %v653 = vsel %vm73, %v651, %v652
  %v654 = vrot.slane %v621, 1
  %v655 = vsel %vm73, %v652, %v654
  %v660 = vpack.c.bf16 %v650, %v648
  %v661 = vpack.c.bf16 %v655, %v653
  %s662 = scalar_lea.vmem %s4, 64
  %v663 = vld [vmem:[%s662] sm:$0xf]
  %v664 = vld [vmem:[%s662 + $0x4] sm:$0xf]
  %v665 = vld [vmem:[%s662 + $0x8] sm:$0xf]
  %v666 = vld [vmem:[%s662 + $0xc] sm:$0xf]
  %v667 = vld [vmem:[%s662 + $0x10] sm:$0xf]
  %v668 = vld [vmem:[%s662 + $0x14] sm:$0xf]
  %v669 = vld [vmem:[%s662 + $0x18] sm:$0xf]
  %v670 = vld [vmem:[%s662 + $0x1c] sm:$0xf]
  %v671 = vld [vmem:[%s662 + $0x20] sm:$0xf]
  %v672 = vld [vmem:[%s662 + $0x24] sm:$0xf]
  %v673 = vld [vmem:[%s662 + $0x28] sm:$0xf]
  %v674 = vld [vmem:[%s662 + $0x2c] sm:$0xf]
  %v675 = vld [vmem:[%s662 + $0x30] sm:$0xf]
  %v676 = vld [vmem:[%s662 + $0x34] sm:$0xf]
  %v677 = vld [vmem:[%s662 + $0x38] sm:$0xf]
  %v678 = vld [vmem:[%s662 + $0x3c] sm:$0xf]
  %v695 = vunpack.c.l.b16 %v663
  %v696 = vunpack.c.l.b16 %v664
  %v697 = vunpack.c.l.b16 %v665
  %v698 = vunpack.c.l.b16 %v666
  %v699 = vunpack.c.l.b16 %v667
  %v700 = vunpack.c.l.b16 %v668
  %v701 = vunpack.c.l.b16 %v669
  %v702 = vunpack.c.l.b16 %v670
  %v703 = vunpack.c.l.b16 %v671
  %v704 = vunpack.c.l.b16 %v672
  %v705 = vunpack.c.l.b16 %v673
  %v706 = vunpack.c.l.b16 %v674
  %v707 = vunpack.c.l.b16 %v675
  %v708 = vunpack.c.l.b16 %v676
  %v709 = vunpack.c.l.b16 %v677
  %v710 = vunpack.c.l.b16 %v678
  %v711 = vpack.c.b16 %v696, %v695
  %v712 = vpack.c.b16 %v698, %v697
  %v713 = vpack.c.b16 %v700, %v699
  %v714 = vpack.c.b16 %v702, %v701
  %v715 = vpack.c.b16 %v704, %v703
  %v716 = vpack.c.b16 %v706, %v705
  %v717 = vpack.c.b16 %v708, %v707
  %v718 = vpack.c.b16 %v710, %v709
  %727 = vmatprep.subr.bf16.mxu0 0
  %728 = vmatpush1.bf16.msra.mxu0 %v711
  %729 = vmatprep.subr.bf16.mxu0 0
  %730 = vmatpush1.bf16.msra.mxu0 %v712
  %731 = vmatprep.subr.bf16.mxu0 0
  %732 = vmatpush1.bf16.msra.mxu0 %v713
  %733 = vmatprep.subr.bf16.mxu0 0
  %734 = vmatpush1.bf16.msra.mxu0 %v714
  %735 = vmatprep.subr.bf16.mxu0 0
  %736 = vmatpush1.bf16.msra.mxu0 %v715
  %737 = vmatprep.subr.bf16.mxu0 0
  %738 = vmatpush1.bf16.msra.mxu0 %v716
  %739 = vmatprep.subr.bf16.mxu0 0
  %740 = vmatpush1.bf16.msra.mxu0 %v717
  %741 = vmatprep.subr.bf16.mxu0 0
  %742 = vmatpush1.bf16.msra.mxu0 %v718
  %743 = vmatprep.subr.bf16.mxu0 0
  %744 = vmatpush1.bf16.msra.mxu0 0
  %745 = vmatprep.subr.bf16.mxu0 0
  %746 = vmatpush1.bf16.msra.mxu0 0
  %747 = vmatprep.subr.bf16.mxu0 0
  %748 = vmatpush1.bf16.msra.mxu0 0
  %749 = vmatprep.subr.bf16.mxu0 0
  %750 = vmatpush1.bf16.msra.mxu0 0
  %751 = vmatprep.subr.bf16.mxu0 0
  %752 = vmatpush1.bf16.msra.mxu0 0
  %753 = vmatprep.subr.bf16.mxu0 0
  %754 = vmatpush1.bf16.msra.mxu0 0
  %755 = vmatprep.subr.bf16.mxu0 0
  %756 = vmatpush1.bf16.msra.mxu0 0
  %757 = vmatprep.subr.bf16.mxu0 0
  %758 = vmatpush1.bf16.msra.mxu0 0
  %759 = vmatprep.mubr.bf16.mxu0 0
  %760 = vmatmul.mubr.bf16.gmra.mrb[0].mxu0 %v660
  %v761 = vpop.f32.mrb[0].mxu0
  %v762 = vadd.f32 0.0, %v761
  %v763 = vpop.f32.mrb[0].mxu0
  %v764 = vpop.f32.mrb[0].mxu0
  %v765 = vadd.f32 0.0, %v764
  %v766 = vpop.f32.mrb[0].mxu0
  %767 = vmatprep.mubr.bf16.mxu0 0
  %768 = vmatmul.mubr.bf16.gmra.mrb[0].mxu0 %v661
  %v769 = vpop.f32.mrb[0].mxu0
  %v770 = vadd.f32 0.0, %v769
  %v771 = vpop.f32.mrb[0].mxu0
  %v772 = vpop.f32.mrb[0].mxu0
  %v773 = vadd.f32 0.0, %v772
  %v774 = vpop.f32.mrb[0].mxu0
  %775 = vdwg.mxu0
  %v792 = vunpack.c.l.b16 %v624
  %v793 = vunpack.c.l.b16 %v625
  %v794 = vunpack.c.l.b16 %v626
  %v795 = vunpack.c.l.b16 %v627
  %v796 = vunpack.c.l.b16 %v628
  %v797 = vunpack.c.l.b16 %v629
  %v798 = vunpack.c.l.b16 %v630
  %v799 = vunpack.c.l.b16 %v631
  %v800 = vunpack.c.l.b16 %v632
  %v801 = vunpack.c.l.b16 %v633
  %v802 = vunpack.c.l.b16 %v634
  %v803 = vunpack.c.l.b16 %v635
  %v804 = vunpack.c.l.b16 %v636
  %v805 = vunpack.c.l.b16 %v637
  %v806 = vunpack.c.l.b16 %v638
  %v807 = vunpack.c.l.b16 %v639
  %v808 = vpack.c.b16 %v793, %v792
  %v809 = vpack.c.b16 %v795, %v794
  %v810 = vpack.c.b16 %v797, %v796
  %v811 = vpack.c.b16 %v799, %v798
  %v812 = vpack.c.b16 %v801, %v800
  %v813 = vpack.c.b16 %v803, %v802
  %v814 = vpack.c.b16 %v805, %v804
  %v815 = vpack.c.b16 %v807, %v806
  %824 = vmatprep.subr.bf16.mxu0 0
  %825 = vmatpush1.bf16.msra.mxu0 %v808
  %826 = vmatprep.subr.bf16.mxu0 0
  %827 = vmatpush1.bf16.msra.mxu0 %v809
  %828 = vmatprep.subr.bf16.mxu0 0
  %829 = vmatpush1.bf16.msra.mxu0 %v810
  %830 = vmatprep.subr.bf16.mxu0 0
  %831 = vmatpush1.bf16.msra.mxu0 %v811
  %832 = vmatprep.subr.bf16.mxu0 0
  %833 = vmatpush1.bf16.msra.mxu0 %v812
  %834 = vmatprep.subr.bf16.mxu0 0
  %835 = vmatpush1.bf16.msra.mxu0 %v813
  %836 = vmatprep.subr.bf16.mxu0 0
  %837 = vmatpush1.bf16.msra.mxu0 %v814
  %838 = vmatprep.subr.bf16.mxu0 0
  %839 = vmatpush1.bf16.msra.mxu0 %v815
  %840 = vmatprep.subr.bf16.mxu0 0
  %841 = vmatpush1.bf16.msra.mxu0 0
  %842 = vmatprep.subr.bf16.mxu0 0
  %843 = vmatpush1.bf16.msra.mxu0 0
  %844 = vmatprep.subr.bf16.mxu0 0
  %845 = vmatpush1.bf16.msra.mxu0 0
  %846 = vmatprep.subr.bf16.mxu0 0
  %847 = vmatpush1.bf16.msra.mxu0 0
  %848 = vmatprep.subr.bf16.mxu0 0
  %849 = vmatpush1.bf16.msra.mxu0 0
  %850 = vmatprep.subr.bf16.mxu0 0
  %851 = vmatpush1.bf16.msra.mxu0 0
  %852 = vmatprep.subr.bf16.mxu0 0
  %853 = vmatpush1.bf16.msra.mxu0 0
  %854 = vmatprep.subr.bf16.mxu0 0
  %855 = vmatpush1.bf16.msra.mxu0 0
  %856 = vmatprep.mubr.bf16.mxu0 0
  %857 = vmatmul.mubr.bf16.gmra.mrb[0].mxu0 %v622
  %v858 = vpop.f32.mrb[0].mxu0
  %v859 = vadd.f32 %v762, %v858
  %v860 = vpop.f32.mrb[0].mxu0
  %v861 = vpop.f32.mrb[0].mxu0
  %v862 = vadd.f32 %v765, %v861
  %v863 = vpop.f32.mrb[0].mxu0
  %864 = vmatprep.mubr.bf16.mxu0 0
  %865 = vmatmul.mubr.bf16.gmra.mrb[0].mxu0 %v623
  %v866 = vpop.f32.mrb[0].mxu0
  %v867 = vadd.f32 %v770, %v866
  %v868 = vpop.f32.mrb[0].mxu0
  %v869 = vpop.f32.mrb[0].mxu0
  %v870 = vadd.f32 %v773, %v869
  %v871 = vpop.f32.mrb[0].mxu0
  %872 = vdwg.mxu0
  %v873 = vrot.slane %v616, 2
  %v874 = vrot.slane %v617, 2
  %v875 = vsel %vm257, %v873, %v874
  %v876 = vrot.slane %v618, 2
  %v877 = vsel %vm257, %v874, %v876
  %v878 = vrot.slane %v619, 2
  %v879 = vrot.slane %v620, 2
  %v880 = vsel %vm257, %v878, %v879
  %v881 = vrot.slane %v621, 2
  %v882 = vsel %vm257, %v879, %v881
  %v887 = vpack.c.bf16 %v877, %v875
  %v888 = vpack.c.bf16 %v882, %v880
  %s889 = scalar_lea.vmem %s4, 128
  %v890 = vld [vmem:[%s889] sm:$0xf]
  %v891 = vld [vmem:[%s889 + $0x4] sm:$0xf]
  %v892 = vld [vmem:[%s889 + $0x8] sm:$0xf]
  %v893 = vld [vmem:[%s889 + $0xc] sm:$0xf]
  %v894 = vld [vmem:[%s889 + $0x10] sm:$0xf]
  %v895 = vld [vmem:[%s889 + $0x14] sm:$0xf]
  %v896 = vld [vmem:[%s889 + $0x18] sm:$0xf]
  %v897 = vld [vmem:[%s889 + $0x1c] sm:$0xf]
  %v898 = vld [vmem:[%s889 + $0x20] sm:$0xf]
  %v899 = vld [vmem:[%s889 + $0x24] sm:$0xf]
  %v900 = vld [vmem:[%s889 + $0x28] sm:$0xf]
  %v901 = vld [vmem:[%s889 + $0x2c] sm:$0xf]
  %v902 = vld [vmem:[%s889 + $0x30] sm:$0xf]
  %v903 = vld [vmem:[%s889 + $0x34] sm:$0xf]
  %v904 = vld [vmem:[%s889 + $0x38] sm:$0xf]
  %v905 = vld [vmem:[%s889 + $0x3c] sm:$0xf]
  %v922 = vunpack.c.l.b16 %v890
  %v923 = vunpack.c.l.b16 %v891
  %v924 = vunpack.c.l.b16 %v892
  %v925 = vunpack.c.l.b16 %v893
  %v926 = vunpack.c.l.b16 %v894
  %v927 = vunpack.c.l.b16 %v895
  %v928 = vunpack.c.l.b16 %v896
  %v929 = vunpack.c.l.b16 %v897
  %v930 = vunpack.c.l.b16 %v898
  %v931 = vunpack.c.l.b16 %v899
  %v932 = vunpack.c.l.b16 %v900
  %v933 = vunpack.c.l.b16 %v901
  %v934 = vunpack.c.l.b16 %v902
  %v935 = vunpack.c.l.b16 %v903
  %v936 = vunpack.c.l.b16 %v904
  %v937 = vunpack.c.l.b16 %v905
  %v938 = vpack.c.b16 %v923, %v922
  %v939 = vpack.c.b16 %v925, %v924
  %v940 = vpack.c.b16 %v927, %v926
  %v941 = vpack.c.b16 %v929, %v928
  %v942 = vpack.c.b16 %v931, %v930
  %v943 = vpack.c.b16 %v933, %v932
  %v944 = vpack.c.b16 %v935, %v934
  %v945 = vpack.c.b16 %v937, %v936
  %954 = vmatprep.subr.bf16.mxu0 0
  %955 = vmatpush1.bf16.msra.mxu0 %v938
  %956 = vmatprep.subr.bf16.mxu0 0
  %957 = vmatpush1.bf16.msra.mxu0 %v939
  %958 = vmatprep.subr.bf16.mxu0 0
  %959 = vmatpush1.bf16.msra.mxu0 %v940
  %960 = vmatprep.subr.bf16.mxu0 0
  %961 = vmatpush1.bf16.msra.mxu0 %v941
  %962 = vmatprep.subr.bf16.mxu0 0
  %963 = vmatpush1.bf16.msra.mxu0 %v942
  %964 = vmatprep.subr.bf16.mxu0 0
  %965 = vmatpush1.bf16.msra.mxu0 %v943
  %966 = vmatprep.subr.bf16.mxu0 0
  %967 = vmatpush1.bf16.msra.mxu0 %v944
  %968 = vmatprep.subr.bf16.mxu0 0
  %969 = vmatpush1.bf16.msra.mxu0 %v945
  %970 = vmatprep.subr.bf16.mxu0 0
  %971 = vmatpush1.bf16.msra.mxu0 0
  %972 = vmatprep.subr.bf16.mxu0 0
  %973 = vmatpush1.bf16.msra.mxu0 0
  %974 = vmatprep.subr.bf16.mxu0 0
  %975 = vmatpush1.bf16.msra.mxu0 0
  %976 = vmatprep.subr.bf16.mxu0 0
  %977 = vmatpush1.bf16.msra.mxu0 0
  %978 = vmatprep.subr.bf16.mxu0 0
  %979 = vmatpush1.bf16.msra.mxu0 0
  %980 = vmatprep.subr.bf16.mxu0 0
  %981 = vmatpush1.bf16.msra.mxu0 0
  %982 = vmatprep.subr.bf16.mxu0 0
  %983 = vmatpush1.bf16.msra.mxu0 0
  %984 = vmatprep.subr.bf16.mxu0 0
  %985 = vmatpush1.bf16.msra.mxu0 0
  %986 = vmatprep.mubr.bf16.mxu0 0
  %987 = vmatmul.mubr.bf16.gmra.mrb[0].mxu0 %v887
  %v988 = vpop.f32.mrb[0].mxu0
  %v989 = vadd.f32 0.0, %v988
  %v990 = vpop.f32.mrb[0].mxu0
  %v991 = vpop.f32.mrb[0].mxu0
  %v992 = vadd.f32 0.0, %v991
  %v993 = vpop.f32.mrb[0].mxu0
  %994 = vmatprep.mubr.bf16.mxu0 0
  %995 = vmatmul.mubr.bf16.gmra.mrb[0].mxu0 %v888
  %v996 = vpop.f32.mrb[0].mxu0
  %v997 = vadd.f32 0.0, %v996
  %v998 = vpop.f32.mrb[0].mxu0
  %v999 = vpop.f32.mrb[0].mxu0
  %v1000 = vadd.f32 0.0, %v999
  %v1001 = vpop.f32.mrb[0].mxu0
  %1002 = vdwg.mxu0
  %v1003 = vadd.f32 %v859, %v989
  %v1004 = vadd.f32 %v862, %v992
  %v1005 = vadd.f32 %v867, %v997
  %v1006 = vadd.f32 %v870, %v1000
  %v1007 = vadd.f32 %v1003, %v1004
  %v1008 = vadd.f32 %v1007, %v1005
  %v1009 = vadd.f32 %v1008, %v1006
  %v1010 = vrot.slane %v1009, 4
  %v1011 = vadd.f32 %v1009, %v1010
  %v1012 = vrot.slane %v1011, 2
  %v1013 = vadd.f32 %v1011, %v1012
  %v1014 = vrot.slane %v1013, 1
  %v1015 = vadd.f32 %v1013, %v1014
  %v1016 = vmul.f32 %v1003, %v1003
  %v1017 = vmul.f32 %v1004, %v1004
  %v1018 = vmul.f32 %v1005, %v1005
  %v1019 = vmul.f32 %v1006, %v1006
  %v1020 = vadd.f32 %v1016, %v1017
  %v1021 = vadd.f32 %v1020, %v1018
  %v1022 = vadd.f32 %v1021, %v1019
  %v1023 = vrot.slane %v1022, 4
  %v1024 = vadd.f32 %v1022, %v1023
  %v1025 = vrot.slane %v1024, 2
  %v1026 = vadd.f32 %v1024, %v1025
  %v1027 = vrot.slane %v1026, 1
  %v1028 = vadd.f32 %v1026, %v1027
  %v1029 = vsel %vm388, %v1015, %v1028
  %v1030 = vld [vmem:[%s7] sm:$0xff]
  %v1031 = vld [vmem:[%s7 + $0x8] sm:$0xff]
  %v1032 = vld [vmem:[%s7 + $0x10] sm:$0xff]
  %v1033 = vld [vmem:[%s7 + $0x18] sm:$0xff]
  %v1034 = vld [vmem:[%s7 + $0x20] sm:$0xff]
  %v1035 = vld [vmem:[%s7 + $0x28] sm:$0xff]
  %v1036 = vld [vmem:[%s7 + $0x30] sm:$0xff]
  %v1037 = vld [vmem:[%s7 + $0x38] sm:$0xff]
  %v1038 = vld [vmem:[%s7 + $0x40] sm:$0xff]
  %v1039 = vld [vmem:[%s7 + $0x48] sm:$0xff]
  %v1040 = vld [vmem:[%s7 + $0x50] sm:$0xff]
  %v1041 = vld [vmem:[%s7 + $0x58] sm:$0xff]
  %v1042 = vld [vmem:[%s7 + $0x60] sm:$0xff]
  %v1043 = vld [vmem:[%s7 + $0x68] sm:$0xff]
  %v1044 = vld [vmem:[%s7 + $0x70] sm:$0xff]
  %v1045 = vld [vmem:[%s7 + $0x78] sm:$0xff]
  %1046 = vmatprep.subr.mxu0 0.0
  %1047 = vmatpush1.msra.mxu0 %v1030
  %1048 = vmatprep.subr.mxu0 0.0
  %1049 = vmatpush1.msra.mxu0 %v1031
  %1050 = vmatprep.subr.mxu0 0.0
  %1051 = vmatpush1.msra.mxu0 %v1032
  %1052 = vmatprep.subr.mxu0 0.0
  %1053 = vmatpush1.msra.mxu0 %v1033
  %1054 = vmatprep.subr.mxu0 0.0
  %1055 = vmatpush1.msra.mxu0 %v1034
  %1056 = vmatprep.subr.mxu0 0.0
  %1057 = vmatpush1.msra.mxu0 %v1035
  %1058 = vmatprep.subr.mxu0 0.0
  %1059 = vmatpush1.msra.mxu0 %v1036
  %1060 = vmatprep.subr.mxu0 0.0
  %1061 = vmatpush1.msra.mxu0 %v1037
  %1062 = vmatprep.subr.mxu0 0.0
  %1063 = vmatpush1.msra.mxu0 %v1038
  %1064 = vmatprep.subr.mxu0 0.0
  %1065 = vmatpush1.msra.mxu0 %v1039
  %1066 = vmatprep.subr.mxu0 0.0
  %1067 = vmatpush1.msra.mxu0 %v1040
  %1068 = vmatprep.subr.mxu0 0.0
  %1069 = vmatpush1.msra.mxu0 %v1041
  %1070 = vmatprep.subr.mxu0 0.0
  %1071 = vmatpush1.msra.mxu0 %v1042
  %1072 = vmatprep.subr.mxu0 0.0
  %1073 = vmatpush1.msra.mxu0 %v1043
  %1074 = vmatprep.subr.mxu0 0.0
  %1075 = vmatpush1.msra.mxu0 %v1044
  %1076 = vmatprep.subr.mxu0 0.0
  %1077 = vmatpush1.msra.mxu0 %v1045
  %1078 = vmatprep.subr.mxu0 0.0
  %1079 = vmatpush1.msra.mxu0 0.0
  %1080 = vmatprep.subr.mxu0 0.0
  %1081 = vmatpush1.msra.mxu0 0.0
  %1082 = vmatprep.subr.mxu0 0.0
  %1083 = vmatpush1.msra.mxu0 0.0
  %1084 = vmatprep.subr.mxu0 0.0
  %1085 = vmatpush1.msra.mxu0 0.0
  %1086 = vmatprep.subr.mxu0 0.0
  %1087 = vmatpush1.msra.mxu0 0.0
  %1088 = vmatprep.subr.mxu0 0.0
  %1089 = vmatpush1.msra.mxu0 0.0
  %1090 = vmatprep.subr.mxu0 0.0
  %1091 = vmatpush1.msra.mxu0 0.0
  %1092 = vmatprep.subr.mxu0 0.0
  %1093 = vmatpush1.msra.mxu0 0.0
  %1094 = vmatprep.subr.mxu0 0.0
  %1095 = vmatpush1.msra.mxu0 0.0
  %1096 = vmatprep.subr.mxu0 0.0
  %1097 = vmatpush1.msra.mxu0 0.0
  %1098 = vmatprep.subr.mxu0 0.0
  %1099 = vmatpush1.msra.mxu0 0.0
  %1100 = vmatprep.subr.mxu0 0.0
  %1101 = vmatpush1.msra.mxu0 0.0
  %1102 = vmatprep.subr.mxu0 0.0
  %1103 = vmatpush1.msra.mxu0 0.0
  %1104 = vmatprep.subr.mxu0 0.0
  %1105 = vmatpush1.msra.mxu0 0.0
  %1106 = vmatprep.subr.mxu0 0.0
  %1107 = vmatpush1.msra.mxu0 0.0
  %1108 = vmatprep.subr.mxu0 0.0
  %1109 = vmatpush1.msra.mxu0 0.0
  %1110 = vmatprep.mubr.f32.mxu0 0.0
  %1111 = vmatmul.mubr.f32.gmra.mrb[0].mxu0 %v1029
  %v1112 = vpop.f32.mrb[0].mxu0
  %v1113 = vadd.f32 0.0, %v1112
  %v1114 = vpop.f32.mrb[0].mxu0
  %1115 = vdwg.mxu0
  %v1116 = vmul.f32 %v1113, %v1113
  %v1118 = vrot.slane %v1116, 7
  %v1120 = vsub.f32 %v1113, %v1118
  %v1121 = vmax.f32 %v1120, 0.0
  %v1122 = vld [vmem:[%s5] sm:$0x1]
  %v1123 = vadd.f32 %v1121, 1e-05
  %v1124 = vrsqrt.pop %v1123
  %v1127 = vunpack.c.l.s4 1966171168
  %v1128 = vunpack.c.0.s8 %v1127
  %v1129 = vlaneseq
  %v1130 = vshrl.u32 %v1129, 7
  %v1131 = vsub.s32 %v1128, %v1130
  %v1132 = vrot.slane %v1124, %v1131
  %v1133 = vcombine.high %v1132, %v1132
  %v1135 = vunpack.c.l.s4 1966171168
  %v1136 = vunpack.c.0.s8 %v1135
  %v1137 = vlaneseq
  %v1138 = vshrl.u32 %v1137, 7
  %v1139 = vsub.s32 %v1136, %v1138
  %v1140 = vrot.slane %v1133, %v1139
  %v1142 = vmul.f32 %v1122, %v1140
  %v1143 = vld [vmem:[%s6] sm:$0x1]
  %v1144 = vmul.f32 %v1113, %v1142
  %v1145 = vsub.f32 %v1143, %v1144
  %v1147 = vlaneseq
  %v1148 = vshrl.u32 %v1147, 7
  %v1149 = vsub.s32 0, %v1148
  %v1150 = vrot.slane %v1145, %v1149
  %v1152 = vsel %vm388, %v1142, %v1150
  %v1153 = vld [vmem:[%s8] sm:$0xff]
  %v1155 = vsel %vm514, %v1152, 0
  %1157 = vmatprep.subr.mxu0 0.0
  %1158 = vmatpush1.msra.mxu0 %v1153
  %1159 = vmatprep.subr.mxu0 0.0
  %1160 = vmatpush1.msra.mxu0 0.0
  %1161 = vmatprep.subr.mxu0 0.0
  %1162 = vmatpush1.msra.mxu0 0.0
  %1163 = vmatprep.subr.mxu0 0.0
  %1164 = vmatpush1.msra.mxu0 0.0
  %1165 = vmatprep.subr.mxu0 0.0
  %1166 = vmatpush1.msra.mxu0 0.0
  %1167 = vmatprep.subr.mxu0 0.0
  %1168 = vmatpush1.msra.mxu0 0.0
  %1169 = vmatprep.subr.mxu0 0.0
  %1170 = vmatpush1.msra.mxu0 0.0
  %1171 = vmatprep.subr.mxu0 0.0
  %1172 = vmatpush1.msra.mxu0 0.0
  %1173 = vmatprep.subr.mxu0 0.0
  %1174 = vmatpush1.msra.mxu0 0.0
  %1175 = vmatprep.subr.mxu0 0.0
  %1176 = vmatpush1.msra.mxu0 0.0
  %1177 = vmatprep.subr.mxu0 0.0
  %1178 = vmatpush1.msra.mxu0 0.0
  %1179 = vmatprep.subr.mxu0 0.0
  %1180 = vmatpush1.msra.mxu0 0.0
  %1181 = vmatprep.subr.mxu0 0.0
  %1182 = vmatpush1.msra.mxu0 0.0
  %1183 = vmatprep.subr.mxu0 0.0
  %1184 = vmatpush1.msra.mxu0 0.0
  %1185 = vmatprep.subr.mxu0 0.0
  %1186 = vmatpush1.msra.mxu0 0.0
  %1187 = vmatprep.subr.mxu0 0.0
  %1188 = vmatpush1.msra.mxu0 0.0
  %1189 = vmatprep.subr.mxu0 0.0
  %1190 = vmatpush1.msra.mxu0 0.0
  %1191 = vmatprep.subr.mxu0 0.0
  %1192 = vmatpush1.msra.mxu0 0.0
  %1193 = vmatprep.subr.mxu0 0.0
  %1194 = vmatpush1.msra.mxu0 0.0
  %1195 = vmatprep.subr.mxu0 0.0
  %1196 = vmatpush1.msra.mxu0 0.0
  %1197 = vmatprep.subr.mxu0 0.0
  %1198 = vmatpush1.msra.mxu0 0.0
  %1199 = vmatprep.subr.mxu0 0.0
  %1200 = vmatpush1.msra.mxu0 0.0
  %1201 = vmatprep.subr.mxu0 0.0
  %1202 = vmatpush1.msra.mxu0 0.0
  %1203 = vmatprep.subr.mxu0 0.0
  %1204 = vmatpush1.msra.mxu0 0.0
  %1205 = vmatprep.subr.mxu0 0.0
  %1206 = vmatpush1.msra.mxu0 0.0
  %1207 = vmatprep.subr.mxu0 0.0
  %1208 = vmatpush1.msra.mxu0 0.0
  %1209 = vmatprep.subr.mxu0 0.0
  %1210 = vmatpush1.msra.mxu0 0.0
  %1211 = vmatprep.subr.mxu0 0.0
  %1212 = vmatpush1.msra.mxu0 0.0
  %1213 = vmatprep.subr.mxu0 0.0
  %1214 = vmatpush1.msra.mxu0 0.0
  %1215 = vmatprep.subr.mxu0 0.0
  %1216 = vmatpush1.msra.mxu0 0.0
  %1217 = vmatprep.subr.mxu0 0.0
  %1218 = vmatpush1.msra.mxu0 0.0
  %1219 = vmatprep.subr.mxu0 0.0
  %1220 = vmatpush1.msra.mxu0 0.0
  %1221 = vmatprep.mubr.f32.mxu0 0.0
  %1222 = vmatmul.mubr.f32.gmra.mrb[0].mxu0 %v1155
  %v1223 = vpop.f32.mrb[0].mxu0
  %v1224 = vadd.f32 0.0, %v1223
  %v1225 = vpop.f32.mrb[0].mxu0
  %1226 = vdwg.mxu0
  %v1227 = vlaneseq
  %v1228 = vshrl.u32 %v1227, 7
  %v1229 = vsub.s32 0, %v1228
  %v1230 = vrot.slane %v1224, %v1229
  %v1231 = vmul.f32 %v1003, %v1230
  %v1232 = vmul.f32 %v1004, %v1230
  %v1233 = vmul.f32 %v1005, %v1230
  %v1234 = vmul.f32 %v1006, %v1230
  %v1235 = vlaneseq
  %v1236 = vshrl.u32 %v1235, 7
  %v1237 = vsub.s32 1, %v1236
  %v1238 = vrot.slane %v1224, %v1237
  %v1239 = vadd.f32 %v1231, %v1238
  %v1240 = vadd.f32 %v1232, %v1238
  %v1241 = vadd.f32 %v1233, %v1238
  %v1242 = vadd.f32 %v1234, %v1238
  %v1243 = vmax.f32 %v1239, 0.0
  %v1244 = vmax.f32 %v1240, 0.0
  %v1245 = vmax.f32 %v1241, 0.0
  %v1246 = vmax.f32 %v1242, 0.0
  %1247 = vst [vmem:[%s9] sm:$0xff] %v1243
  %1248 = vst [vmem:[%s9 + $0x8] sm:$0xff] %v1244
  %1249 = vst [vmem:[%s9 + $0x10] sm:$0xff] %v1245
  %1250 = vst [vmem:[%s9 + $0x18] sm:$0xff] %v1246
  // Predicated region
  $region38: #{double_conv.1} parent=0 // pred_check
    _
  $region39: #{double_conv.1} parent=0 // pred_check_branch
    %1252 = sbr.rel (0) target = $region41
  $region40: #{double_conv.1} parent=0 // pred_region
    _
  $region41: #{double_conv.1} parent=0 // pred_fallthru
    _
  // Predicated region
  $region42: #{double_conv.1} parent=0 // pred_check
    _
  $region43: #{double_conv.1} parent=0 // pred_check_branch
    %1254 = sbr.rel (0) target = $region45
  $region44: #{double_conv.1} parent=0 // pred_region
    _
  $region45: #{double_conv.1} parent=0 // pred_fallthru
    _

</llo_original>
